<compile_context>
chip_gen: v7x
topology: tpu7x:2x2x1
jax: 0.10.0
libtpu: 0.0.40
codegen_flags: <defaults>
</compile_context>

<pallas_src>
import math
import functools

import jax
import jax.numpy as jnp
from jax.experimental import pallas as pl
from jax.experimental.pallas import tpu as pltpu

LANE = 128                         # lane width: pad all minor dims to a multiple of 128
ROW_TILE = 512                     # preferred row tile (multiple of 128)
K_TILE = 512                       # preferred reduction tile over N for adj @ x
_VMEM_LIMIT = 48 * 1024 * 1024     # scoped-VMEM budget; leaves headroom on v7x (64 MiB)
_RESIDENT_X_BYTES = 12 * 1024 * 1024  # keep bf16 layer-input panel resident below this


# ---------------------------------------------------------------------------
# Small helpers
# ---------------------------------------------------------------------------
def _round_up(x, m):
    return (x + m - 1) // m * m


def _choose_row_tiling(n, pref=ROW_TILE):
    """Pad N to a multiple of the tile and pick the row tile.

    Returns (n_pad, tm) with tm | n_pad and tm % 128 == 0.  Large graphs are
    padded to a multiple of `pref` so tiles never degrade to 128; small graphs
    try to expose >= 2 row tiles (v7x megacore balance).
    """
    n_pad = _round_up(n, LANE)
    if n_pad > pref:
        return _round_up(n, pref), pref
    if n_pad % (2 * LANE) == 0 and n_pad >= 2 * LANE:
        return n_pad, n_pad // 2
    return n_pad, n_pad


def _pad2d(a, rows, cols):
    out = jnp.zeros((rows, cols), a.dtype)
    return out.at[: a.shape[0], : a.shape[1]].set(a)


# ---------------------------------------------------------------------------
# Linear (fc) kernel: y = relu?(x @ W + b), optional pad-row masking,
# optional extra bf16 output (for the next layer's spmm operand).
# ---------------------------------------------------------------------------
def _linear_kernel(x_ref, w_ref, b_ref, o_ref, o_bf_ref=None, *, relu, n_valid, tm):
    y = jnp.dot(x_ref[...], w_ref[...], preferred_element_type=jnp.float32)
    y = y + b_ref[...]
    if relu:
        y = jnp.maximum(y, 0.0)
    if n_valid is not None:
        row = pl.program_id(0) * tm + jax.lax.broadcasted_iota(jnp.int32, y.shape, 0)
        y = jnp.where(row < n_valid, y, 0.0)       # zero the padded rows
    o_ref[...] = y.astype(o_ref.dtype)
    if o_bf_ref is not None:
        o_bf_ref[...] = y.astype(jnp.bfloat16)


def linear(x, w, b, *, relu, tm, n_valid=None, emit_bf16=False):
    # GCN-scale feature dims are small, so the full K dim rides in one tile and
    # W / b stay VMEM-resident (no K reduction axis, no per-row-tile W re-DMA).
    n, kdim = x.shape
    out = w.shape[1]
    assert n % tm == 0
    out_spec = pl.BlockSpec((tm, out), lambda i: (i, 0))
    if emit_bf16:
        out_shape = (jax.ShapeDtypeStruct((n, out), jnp.float32),
                     jax.ShapeDtypeStruct((n, out), jnp.bfloat16))
        out_specs = (out_spec, pl.BlockSpec((tm, out), lambda i: (i, 0)))
    else:
        out_shape = jax.ShapeDtypeStruct((n, out), jnp.float32)
        out_specs = out_spec
    return pl.pallas_call(
        functools.partial(_linear_kernel, relu=relu, n_valid=n_valid, tm=tm),
        out_shape=out_shape,
        grid_spec=pltpu.PrefetchScalarGridSpec(
            num_scalar_prefetch=0,
            grid=(n // tm,),
            in_specs=[
                pl.BlockSpec((tm, kdim), lambda i: (i, 0)),   # x row tile (full K)
                pl.BlockSpec(w.shape, lambda i: (0, 0)),      # W, VMEM-resident
                pl.BlockSpec(b.shape, lambda i: (0, 0)),      # bias, VMEM-resident
            ],
            out_specs=out_specs,
        ),
        compiler_params=pltpu.CompilerParams(
            dimension_semantics=("parallel",),
            vmem_limit_bytes=_VMEM_LIMIT,
        ),
    )(x, w, b)


# ---------------------------------------------------------------------------
# GraphConvolution layer kernel: hi = adj @ x (tiled bf16 spmm, f32 accum),
# GCNII epilogue (theta folded into W, bf16 epilogue matmul, f32 residual), ReLU.
# ---------------------------------------------------------------------------
def _gcn_layer_kernel(adj_ref, x_ref, h0_ref, w_ref, o_ref, acc_ref, *,
                      alpha, theta, variant, hdim, tk, x_resident):
    k = pl.program_id(1)

    @pl.when(k == 0)
    def _():
        acc_ref[...] = jnp.zeros_like(acc_ref)

    if x_resident:
        ks = pl.multiple_of(k * tk, tk)              # resident panel: slice the k block
        x_blk = x_ref[pl.ds(ks, tk), :]
    else:
        x_blk = x_ref[...]                           # streamed fallback
    acc_ref[...] += jnp.dot(adj_ref[...], x_blk, preferred_element_type=jnp.float32)

    @pl.when(k == pl.num_programs(1) - 1)
    def _():
        hi = acc_ref[...]
        h0 = h0_ref[...]
        r = (1.0 - alpha) * hi + alpha * h0          # residual path stays f32
        # theta is already folded into w (host side, at init): w := bf16(theta * W)
        if variant:
            # support = concat([hi, h0], 1) -> split W instead of materializing concat
            mm = (jnp.dot(hi.astype(jnp.bfloat16), w_ref[0:hdim, :],
                          preferred_element_type=jnp.float32)
                  + jnp.dot(h0.astype(jnp.bfloat16), w_ref[hdim:2 * hdim, :],
                            preferred_element_type=jnp.float32))
        else:
            # support == r
            mm = jnp.dot(r.astype(jnp.bfloat16), w_ref[...],
                         preferred_element_type=jnp.float32)
        out = mm + (1.0 - theta) * r
        # GraphConvolution is built with residual=False in GCNII; act_fn=ReLU here.
        o_ref[...] = jnp.maximum(out, 0.0).astype(o_ref.dtype)


def gcn_layer(adj_bf16, x_bf16, h0, w_bf16, *, alpha, theta, variant, tm, tk,
              out_dtype):
    n_pad, h = h0.shape
    assert n_pad % tm == 0 and n_pad % tk == 0
    x_resident = (x_bf16.size * 2) <= _RESIDENT_X_BYTES
    if x_resident:
        # Whole bf16 layer-input panel lives in VMEM (constant index_map),
        # eliminating its per-row-tile re-fetch from HBM.
        x_spec = pl.BlockSpec(x_bf16.shape, lambda i, k: (0, 0))
    else:
        x_spec = pl.BlockSpec((tk, h), lambda i, k: (k, 0))
    return pl.pallas_call(
        functools.partial(_gcn_layer_kernel, alpha=float(alpha),
                          theta=float(theta), variant=bool(variant), hdim=h,
                          tk=tk, x_resident=x_resident),
        out_shape=jax.ShapeDtypeStruct((n_pad, h), out_dtype),
        grid_spec=pltpu.PrefetchScalarGridSpec(
            num_scalar_prefetch=0,
            grid=(n_pad // tm, n_pad // tk),
            in_specs=[
                pl.BlockSpec((tm, tk), lambda i, k: (i, k)),      # adj tile (bf16)
                x_spec,                                           # layer input (bf16)
                pl.BlockSpec((tm, h), lambda i, k: (i, 0)),       # h0 rows (f32)
                pl.BlockSpec(w_bf16.shape, lambda i, k: (0, 0)),  # theta*W (bf16, resident)
            ],
            out_specs=pl.BlockSpec((tm, h), lambda i, k: (i, 0)),
            scratch_shapes=[pltpu.VMEM((tm, h), jnp.float32)],
        ),
        compiler_params=pltpu.CompilerParams(
            dimension_semantics=("parallel", "arbitrary"),
            vmem_limit_bytes=_VMEM_LIMIT,
        ),
    )(adj_bf16, x_bf16, h0, w_bf16)


# ---------------------------------------------------------------------------
# Forward pass (jitted; operates on lane-padded parameters + pre-padded bf16 adj)
# ---------------------------------------------------------------------------
def _gcnii_forward_impl(params, x, adj_bf16, *, nlayers, nhidden, nclass, nfeat,
                        lamda, alpha, variant):
    n = x.shape[0]
    n_pad = adj_bf16.shape[0]
    f_pad = params["fc0_w"].shape[0]

    n_pad_chk, tm = _choose_row_tiling(n)
    assert n_pad_chk == n_pad
    tk = K_TILE if (n_pad >= K_TILE and n_pad % K_TILE == 0) else n_pad

    x_p = jnp.zeros((n_pad, f_pad), jnp.float32).at[:n, :nfeat].set(x)

    # x = F.dropout(x) -> identity at inference.
    li, li_bf = linear(x_p, params["fc0_w"], params["fc0_b"], relu=True,
                       tm=tm, n_valid=n, emit_bf16=True)     # ReLU(fc0(x)), pad rows zeroed
    h0 = li
    hidden_bf = li_bf
    hidden_f32 = li
    for i in range(nlayers):
        theta = math.log(lamda / (i + 1) + 1.0)
        last = (i == nlayers - 1)
        hidden = gcn_layer(adj_bf16, hidden_bf, h0, params["conv_w"][i],
                           alpha=alpha, theta=theta, variant=variant,
                           tm=tm, tk=tk,
                           out_dtype=jnp.float32 if last else jnp.bfloat16)
        if last:
            hidden_f32 = hidden          # f32 output feeds fc1 / hidden_emb
        else:
            hidden_bf = hidden           # bf16 output feeds the next layer's spmm
    out = linear(hidden_f32, params["fc1_w"], params["fc1_b"], relu=False, tm=tm)
    return out[:n, :nclass], hidden_f32[:n, :nhidden]


# ---------------------------------------------------------------------------
# GCNII model (deterministic parameter init mirroring the PyTorch module)
# ---------------------------------------------------------------------------
class GCNII:
    def __init__(self, nfeat, nlayers, nhidden, nclass, dropout, lamda, alpha,
                 variant, key):
        self.nfeat, self.nlayers = nfeat, nlayers
        self.nhidden, self.nclass = nhidden, nclass
        self.lamda, self.alpha = float(lamda), float(alpha)
        self.variant = bool(variant)
        self.dropout = dropout   # identity in inference mode

        keys = jax.random.split(key, nlayers + 4)
        in_conv = 2 * nhidden if variant else nhidden

        # --- logical (unpadded) parameters, PyTorch-style init ---
        stdv = 1.0 / math.sqrt(nhidden)
        self.conv_w = [
            jax.random.uniform(keys[i], (in_conv, nhidden),
                               minval=-stdv, maxval=stdv, dtype=jnp.float32)
            for i in range(nlayers)
        ]
        b0 = 1.0 / math.sqrt(nfeat)
        self.fc0_w = jax.random.uniform(keys[nlayers], (nfeat, nhidden),
                                        minval=-b0, maxval=b0, dtype=jnp.float32)
        self.fc0_b = jax.random.uniform(keys[nlayers + 1], (1, nhidden),
                                        minval=-b0, maxval=b0, dtype=jnp.float32)
        b1 = 1.0 / math.sqrt(nhidden)
        self.fc1_w = jax.random.uniform(keys[nlayers + 2], (nhidden, nclass),
                                        minval=-b1, maxval=b1, dtype=jnp.float32)
        self.fc1_b = jax.random.uniform(keys[nlayers + 3], (1, nclass),
                                        minval=-b1, maxval=b1, dtype=jnp.float32)

        # --- lane-padded kernel parameters (theta folded, conv weights in bf16) ---
        H = _round_up(nhidden, LANE)
        F = _round_up(nfeat, LANE)
        C = _round_up(nclass, LANE)
        conv_w_pad = []
        for i, w in enumerate(self.conv_w):
            theta = math.log(self.lamda / (i + 1) + 1.0)
            if variant:
                wp = jnp.concatenate([_pad2d(w[:nhidden], H, H),
                                      _pad2d(w[nhidden:], H, H)], axis=0)
            else:
                wp = _pad2d(w, H, H)
            conv_w_pad.append((theta * wp).astype(jnp.bfloat16))
        self._params = dict(
            conv_w=tuple(conv_w_pad),
            fc0_w=_pad2d(self.fc0_w, F, H), fc0_b=_pad2d(self.fc0_b, 1, H),
            fc1_w=_pad2d(self.fc1_w, H, C), fc1_b=_pad2d(self.fc1_b, 1, C),
        )
        self._adj_key = None
        self._adj_val = None
        self._fwd = jax.jit(functools.partial(
            _gcnii_forward_impl, nlayers=nlayers, nhidden=nhidden,
            nclass=nclass, nfeat=nfeat, lamda=self.lamda, alpha=self.alpha,
            variant=self.variant))

    def _prepare_adj(self, adj):
        # adj is static per graph: pad + cast to bf16 once and cache it so the
        # per-call forward does not re-stream 3x N_pad^2 words through HBM.
        n = adj.shape[0]
        n_pad, _ = _choose_row_tiling(n)
        key = (id(adj), n, n_pad)
        if self._adj_key != key:
            adj_p = jnp.zeros((n_pad, n_pad), jnp.bfloat16)
            adj_p = adj_p.at[:n, :n].set(adj.astype(jnp.bfloat16))
            self._adj_key = key
            self._adj_val = jax.block_until_ready(adj_p)
        return self._adj_val

    def forward(self, x, adj):
        adj_p = self._prepare_adj(adj)
        return self._fwd(self._params, x, adj_p)


# ---------------------------------------------------------------------------
# Pure-JAX references for sanity checking
# ---------------------------------------------------------------------------
def reference_forward(model, x, adj, *, mimic_bf16):
    def bf(a):
        return a.astype(jnp.bfloat16).astype(jnp.float32) if mimic_bf16 else a

    adj_r = bf(adj)
    li = jnp.maximum(x @ model.fc0_w + model.fc0_b, 0.0)
    h0 = li
    for i in range(model.nlayers):
        theta = math.log(model.lamda / (i + 1) + 1.0)
        hi = adj_r @ bf(li)
        r = (1 - model.alpha) * hi + model.alpha * h0
        if model.variant:
            w = model.conv_w[i]
            mm = (bf(hi) @ bf(theta * w[:model.nhidden])
                  + bf(h0) @ bf(theta * w[model.nhidden:]))
        else:
            mm = bf(r) @ bf(theta * model.conv_w[i])
        li = jnp.maximum(mm + (1 - theta) * r, 0.0)
    hidden = li
    out = hidden @ model.fc1_w + model.fc1_b
    return out, hidden


if __name__ == "__main__":
    key = jax.random.PRNGKey(0)
    k_x, k_adj, k_p0, k_p1 = jax.random.split(key, 4)

    N, nfeat, nhidden, nclass, nlayers = 64, 16, 32, 8, 2
    lamda, alpha, dropout = 0.5, 0.1, 0.5

    x = jax.random.normal(k_x, (N, nfeat), dtype=jnp.float32)
    a = jax.random.uniform(k_adj, (N, N), dtype=jnp.float32)
    a = (a + a.T) * 0.5 + jnp.eye(N, dtype=jnp.float32)
    adj = a / jnp.sum(a, axis=1, keepdims=True)

    for variant, pkey in ((False, k_p0), (True, k_p1)):
        model = GCNII(nfeat, nlayers, nhidden, nclass, dropout, lamda, alpha,
                      variant, pkey)
        out, hidden_emb = model.forward(x, adj)
        out = jax.block_until_ready(out)
        hidden_emb = jax.block_until_ready(hidden_emb)

        assert out.shape == (N, nclass) and hidden_emb.shape == (N, nhidden)

        # Exact-semantics check (reference mimics the kernel's bf16 operands).
        ref_out, ref_hidden = reference_forward(model, x, adj, mimic_bf16=True)
        assert jnp.allclose(out, ref_out, atol=3e-3, rtol=3e-3)
        assert jnp.allclose(hidden_emb, ref_hidden, atol=3e-3, rtol=3e-3)

        # Looser check against the full-f32 model semantics.
        f32_out, f32_hidden = reference_forward(model, x, adj, mimic_bf16=False)
        assert jnp.allclose(out, f32_out, atol=5e-2, rtol=5e-2)
        assert jnp.allclose(hidden_emb, f32_hidden, atol=5e-2, rtol=5e-2)

    print("KERNEL_OK")
</pallas_src>

<mosaic_0001>
module attributes {stable_mosaic.version = 11 : i64} {
  func.func @_linear_kernel(%arg0: i32, %arg1: memref<128x128xf32, #tpu.memory_space<vmem>>, %arg2: memref<128x128xf32, #tpu.memory_space<vmem>>, %arg3: memref<1x128xf32, #tpu.memory_space<vmem>>, %arg4: memref<128x128xf32, #tpu.memory_space<vmem>>, %arg5: memref<128x128xbf16, #tpu.memory_space<vmem>>) attributes {dimension_semantics = [#tpu.dimension_semantics<parallel>], iteration_bounds = array<i64: 1>, scalar_prefetch = 0 : i64, scratch_operands = 0 : i64, tpu.core_type = #tpu.core_type<tc>, window_params = [{transform_indices = @transform_0, window_bounds = array<i64: 128, 128>}, {pipeline_mode = #tpu.pipeline_mode<synchronous>, transform_indices = @transform_1, window_bounds = array<i64: 128, 128>}, {pipeline_mode = #tpu.pipeline_mode<synchronous>, transform_indices = @transform_2, window_bounds = array<i64: 1, 128>}, {transform_indices = @transform_3, window_bounds = array<i64: 128, 128>}, {transform_indices = @transform_4, window_bounds = array<i64: 128, 128>}]} {
    %c0 = arith.constant 0 : index
    %c0_0 = arith.constant 0 : index
    %0 = vector.load %arg1[%c0, %c0_0] : memref<128x128xf32, #tpu.memory_space<vmem>>, vector<128x128xf32>
    %c0_1 = arith.constant 0 : index
    %c0_2 = arith.constant 0 : index
    %1 = vector.load %arg2[%c0_1, %c0_2] : memref<128x128xf32, #tpu.memory_space<vmem>>, vector<128x128xf32>
    %cst = arith.constant dense<0.000000e+00> : vector<128x128xf32>
    %2 = tpu.matmul %0, %1, %cst {dimension_numbers = #tpu.dot_dimension_numbers<[1], [0], [0], [1], [0, 0, 1, 1], [], []>} : vector<128x128xf32>, vector<128x128xf32>, vector<128x128xf32> -> vector<128x128xf32>
    %c0_3 = arith.constant 0 : index
    %c0_4 = arith.constant 0 : index
    %3 = vector.load %arg3[%c0_3, %c0_4] : memref<1x128xf32, #tpu.memory_space<vmem>>, vector<1x128xf32>
    %4 = vector.broadcast %3 : vector<1x128xf32> to vector<128x128xf32>
    %5 = arith.addf %2, %4 : vector<128x128xf32>
    %cst_5 = arith.constant 0.000000e+00 : f32
    %6 = vector.broadcast %cst_5 : f32 to vector<128x128xf32>
    %7 = arith.maximumf %5, %6 : vector<128x128xf32>
    %c128_i32 = arith.constant 128 : i32
    %8 = arith.muli %arg0, %c128_i32 : i32
    %9 = tpu.iota {dimensions = array<i32: 0>} : vector<128x128xi32>
    %10 = vector.broadcast %8 : i32 to vector<128x128xi32>
    %11 = arith.addi %10, %9 : vector<128x128xi32>
    %c64_i32 = arith.constant 64 : i32
    %12 = vector.broadcast %c64_i32 : i32 to vector<128x128xi32>
    %13 = arith.cmpi slt, %11, %12 : vector<128x128xi32>
    %cst_6 = arith.constant 0.000000e+00 : f32
    %14 = vector.broadcast %cst_6 : f32 to vector<128x128xf32>
    %15 = arith.select %13, %7, %14 : vector<128x128xi1>, vector<128x128xf32>
    %c0_7 = arith.constant 0 : index
    %c0_8 = arith.constant 0 : index
    %16 = vector.load %arg4[%c0_7, %c0_8] : memref<128x128xf32, #tpu.memory_space<vmem>>, vector<128x128xf32>
    tpu.vector_store %arg4[%c0_7, %c0_8], %15 {strides = array<i32>} : memref<128x128xf32, #tpu.memory_space<vmem>>, vector<128x128xf32>,
    %17 = arith.truncf %15 : vector<128x128xf32> to vector<128x128xbf16>
    %c0_9 = arith.constant 0 : index
    %c0_10 = arith.constant 0 : index
    %18 = vector.load %arg5[%c0_9, %c0_10] : memref<128x128xbf16, #tpu.memory_space<vmem>>, vector<128x128xbf16>
    tpu.vector_store %arg5[%c0_9, %c0_10], %17 {strides = array<i32>} : memref<128x128xbf16, #tpu.memory_space<vmem>>, vector<128x128xbf16>,
    return
  }
  func.func @transform_0(%arg0: i32) -> (i32, i32) {
    %c0_i32 = arith.constant 0 : i32
    %c0_i32_0 = arith.constant 0 : i32
    return %arg0, %c0_i32 : i32, i32
  }
  func.func @transform_1(%arg0: i32) -> (i32, i32) {
    %c0_i32 = arith.constant 0 : i32
    %c0_i32_0 = arith.constant 0 : i32
    %c0_i32_1 = arith.constant 0 : i32
    return %c0_i32, %c0_i32_0 : i32, i32
  }
  func.func @transform_2(%arg0: i32) -> (i32, i32) {
    %c0_i32 = arith.constant 0 : i32
    %c0_i32_0 = arith.constant 0 : i32
    %c0_i32_1 = arith.constant 0 : i32
    return %c0_i32, %c0_i32_0 : i32, i32
  }
  func.func @transform_3(%arg0: i32) -> (i32, i32) {
    %c0_i32 = arith.constant 0 : i32
    %c0_i32_0 = arith.constant 0 : i32
    return %arg0, %c0_i32 : i32, i32
  }
  func.func @transform_4(%arg0: i32) -> (i32, i32) {
    %c0_i32 = arith.constant 0 : i32
    %c0_i32_0 = arith.constant 0 : i32
    return %arg0, %c0_i32 : i32, i32
  }
}

module attributes {stable_mosaic.version = 11 : i64} {
  func.func @_gcn_layer_kernel(%arg0: i32, %arg1: i32, %arg2: memref<128x128xbf16, #tpu.memory_space<vmem>>, %arg3: memref<128x128xbf16, #tpu.memory_space<vmem>>, %arg4: memref<128x128xf32, #tpu.memory_space<vmem>>, %arg5: memref<128x128xbf16, #tpu.memory_space<vmem>>, %arg6: memref<128x128xbf16, #tpu.memory_space<vmem>>, %arg7: memref<128x128xf32, #tpu.memory_space<vmem>>) attributes {dimension_semantics = [#tpu.dimension_semantics<parallel>, #tpu.dimension_semantics<arbitrary>], iteration_bounds = array<i64: 1, 1>, scalar_prefetch = 0 : i64, scratch_operands = 1 : i64, tpu.core_type = #tpu.core_type<tc>, window_params = [{transform_indices = @transform_0, window_bounds = array<i64: 128, 128>}, {pipeline_mode = #tpu.pipeline_mode<synchronous>, transform_indices = @transform_1, window_bounds = array<i64: 128, 128>}, {transform_indices = @transform_2, window_bounds = array<i64: 128, 128>}, {pipeline_mode = #tpu.pipeline_mode<synchronous>, transform_indices = @transform_3, window_bounds = array<i64: 128, 128>}, {transform_indices = @transform_4, window_bounds = array<i64: 128, 128>}]} {
    %c0_i32 = arith.constant 0 : i32
    %0 = arith.cmpi eq, %arg1, %c0_i32 : i32
    %1 = arith.extui %0 : i1 to i32
    %c0_i32_0 = arith.constant 0 : i32
    %2 = arith.cmpi ne, %1, %c0_i32_0 : i32
    scf.if %2 {
      %cst_9 = arith.constant 0.000000e+00 : f32
      %15 = vector.broadcast %cst_9 : f32 to vector<128x128xf32>
      %c0_10 = arith.constant 0 : index
      %c0_11 = arith.constant 0 : index
      %16 = vector.load %arg7[%c0_10, %c0_11] : memref<128x128xf32, #tpu.memory_space<vmem>>, vector<128x128xf32>
      tpu.vector_store %arg7[%c0_10, %c0_11], %15 {strides = array<i32>} : memref<128x128xf32, #tpu.memory_space<vmem>>, vector<128x128xf32>,
    } else {
    }
    %c128_i32 = arith.constant 128 : i32
    %3 = arith.muli %arg1, %c128_i32 : i32
    %4 = tpu.assume_multiple %3, 128 : i32
    %5 = arith.index_cast %4 : i32 to index
    %c0 = arith.constant 0 : index
    %6 = vector.load %arg3[%5, %c0] : memref<128x128xbf16, #tpu.memory_space<vmem>>, vector<128x128xbf16>
    %c0_1 = arith.constant 0 : index
    %c0_2 = arith.constant 0 : index
    %7 = vector.load %arg7[%c0_1, %c0_2] : memref<128x128xf32, #tpu.memory_space<vmem>>, vector<128x128xf32>
    %c0_3 = arith.constant 0 : index
    %c0_4 = arith.constant 0 : index
    %8 = vector.load %arg2[%c0_3, %c0_4] : memref<128x128xbf16, #tpu.memory_space<vmem>>, vector<128x128xbf16>
    %cst = arith.constant dense<0.000000e+00> : vector<128x128xf32>
    %9 = tpu.matmul %8, %6, %cst {dimension_numbers = #tpu.dot_dimension_numbers<[1], [0], [0], [1], [0, 0, 1, 1], [], []>} : vector<128x128xbf16>, vector<128x128xbf16>, vector<128x128xf32> -> vector<128x128xf32>
    %10 = arith.addf %7, %9 : vector<128x128xf32>
    %c0_5 = arith.constant 0 : index
    %c0_6 = arith.constant 0 : index
    %11 = vector.load %arg7[%c0_5, %c0_6] : memref<128x128xf32, #tpu.memory_space<vmem>>, vector<128x128xf32>
    tpu.vector_store %arg7[%c0_5, %c0_6], %10 {strides = array<i32>} : memref<128x128xf32, #tpu.memory_space<vmem>>, vector<128x128xf32>,
    %c0_i32_7 = arith.constant 0 : i32
    %12 = arith.cmpi eq, %arg1, %c0_i32_7 : i32
    %13 = arith.extui %12 : i1 to i32
    %c0_i32_8 = arith.constant 0 : i32
    %14 = arith.cmpi ne, %13, %c0_i32_8 : i32
    scf.if %14 {
      %c0_9 = arith.constant 0 : index
      %c0_10 = arith.constant 0 : index
      %15 = vector.load %arg7[%c0_9, %c0_10] : memref<128x128xf32, #tpu.memory_space<vmem>>, vector<128x128xf32>
      %c0_11 = arith.constant 0 : index
      %c0_12 = arith.constant 0 : index
      %16 = vector.load %arg4[%c0_11, %c0_12] : memref<128x128xf32, #tpu.memory_space<vmem>>, vector<128x128xf32>
      %cst_13 = arith.constant 0.899999976 : f32
      %17 = vector.broadcast %cst_13 : f32 to vector<128x128xf32>
      %18 = arith.mulf %17, %15 : vector<128x128xf32>
      %cst_14 = arith.constant 1.000000e-01 : f32
      %19 = vector.broadcast %cst_14 : f32 to vector<128x128xf32>
      %20 = arith.mulf %19, %16 : vector<128x128xf32>
      %21 = arith.addf %18, %20 : vector<128x128xf32>
      %22 = arith.truncf %21 : vector<128x128xf32> to vector<128x128xbf16>
      %c0_15 = arith.constant 0 : index
      %c0_16 = arith.constant 0 : index
      %23 = vector.load %arg5[%c0_15, %c0_16] : memref<128x128xbf16, #tpu.memory_space<vmem>>, vector<128x128xbf16>
      %cst_17 = arith.constant dense<0.000000e+00> : vector<128x128xf32>
      %24 = tpu.matmul %22, %23, %cst_17 {dimension_numbers = #tpu.dot_dimension_numbers<[1], [0], [0], [1], [0, 0, 1, 1], [], []>} : vector<128x128xbf16>, vector<128x128xbf16>, vector<128x128xf32> -> vector<128x128xf32>
      %cst_18 = arith.constant 0.594534874 : f32
      %25 = vector.broadcast %cst_18 : f32 to vector<128x128xf32>
      %26 = arith.mulf %25, %21 : vector<128x128xf32>
      %27 = arith.addf %24, %26 : vector<128x128xf32>
      %cst_19 = arith.constant 0.000000e+00 : f32
      %28 = vector.broadcast %cst_19 : f32 to vector<128x128xf32>
      %29 = arith.maximumf %27, %28 : vector<128x128xf32>
      %30 = arith.truncf %29 : vector<128x128xf32> to vector<128x128xbf16>
      %c0_20 = arith.constant 0 : index
      %c0_21 = arith.constant 0 : index
      %31 = vector.load %arg6[%c0_20, %c0_21] : memref<128x128xbf16, #tpu.memory_space<vmem>>, vector<128x128xbf16>
      tpu.vector_store %arg6[%c0_20, %c0_21], %30 {strides = array<i32>} : memref<128x128xbf16, #tpu.memory_space<vmem>>, vector<128x128xbf16>,
    } else {
    }
    return
  }
  func.func @transform_0(%arg0: i32, %arg1: i32) -> (i32, i32) {
    %c0_i32 = arith.constant 0 : i32
    return %arg0, %arg1 : i32, i32
  }
  func.func @transform_1(%arg0: i32, %arg1: i32) -> (i32, i32) {
    %c0_i32 = arith.constant 0 : i32
    %c0_i32_0 = arith.constant 0 : i32
    %c0_i32_1 = arith.constant 0 : i32
    return %c0_i32, %c0_i32_0 : i32, i32
  }
  func.func @transform_2(%arg0: i32, %arg1: i32) -> (i32, i32) {
    %c0_i32 = arith.constant 0 : i32
    %c0_i32_0 = arith.constant 0 : i32
    return %arg0, %c0_i32 : i32, i32
  }
  func.func @transform_3(%arg0: i32, %arg1: i32) -> (i32, i32) {
    %c0_i32 = arith.constant 0 : i32
    %c0_i32_0 = arith.constant 0 : i32
    %c0_i32_1 = arith.constant 0 : i32
    return %c0_i32, %c0_i32_0 : i32, i32
  }
  func.func @transform_4(%arg0: i32, %arg1: i32) -> (i32, i32) {
    %c0_i32 = arith.constant 0 : i32
    %c0_i32_0 = arith.constant 0 : i32
    return %arg0, %c0_i32 : i32, i32
  }
}

module attributes {stable_mosaic.version = 11 : i64} {
  func.func @_gcn_layer_kernel(%arg0: i32, %arg1: i32, %arg2: memref<128x128xbf16, #tpu.memory_space<vmem>>, %arg3: memref<128x128xbf16, #tpu.memory_space<vmem>>, %arg4: memref<128x128xf32, #tpu.memory_space<vmem>>, %arg5: memref<128x128xbf16, #tpu.memory_space<vmem>>, %arg6: memref<128x128xf32, #tpu.memory_space<vmem>>, %arg7: memref<128x128xf32, #tpu.memory_space<vmem>>) attributes {dimension_semantics = [#tpu.dimension_semantics<parallel>, #tpu.dimension_semantics<arbitrary>], iteration_bounds = array<i64: 1, 1>, scalar_prefetch = 0 : i64, scratch_operands = 1 : i64, tpu.core_type = #tpu.core_type<tc>, window_params = [{transform_indices = @transform_0, window_bounds = array<i64: 128, 128>}, {pipeline_mode = #tpu.pipeline_mode<synchronous>, transform_indices = @transform_1, window_bounds = array<i64: 128, 128>}, {transform_indices = @transform_2, window_bounds = array<i64: 128, 128>}, {pipeline_mode = #tpu.pipeline_mode<synchronous>, transform_indices = @transform_3, window_bounds = array<i64: 128, 128>}, {transform_indices = @transform_4, window_bounds = array<i64: 128, 128>}]} {
    %c0_i32 = arith.constant 0 : i32
    %0 = arith.cmpi eq, %arg1, %c0_i32 : i32
    %1 = arith.extui %0 : i1 to i32
    %c0_i32_0 = arith.constant 0 : i32
    %2 = arith.cmpi ne, %1, %c0_i32_0 : i32
    scf.if %2 {
      %cst_9 = arith.constant 0.000000e+00 : f32
      %15 = vector.broadcast %cst_9 : f32 to vector<128x128xf32>
      %c0_10 = arith.constant 0 : index
      %c0_11 = arith.constant 0 : index
      %16 = vector.load %arg7[%c0_10, %c0_11] : memref<128x128xf32, #tpu.memory_space<vmem>>, vector<128x128xf32>
      tpu.vector_store %arg7[%c0_10, %c0_11], %15 {strides = array<i32>} : memref<128x128xf32, #tpu.memory_space<vmem>>, vector<128x128xf32>,
    } else {
    }
    %c128_i32 = arith.constant 128 : i32
    %3 = arith.muli %arg1, %c128_i32 : i32
    %4 = tpu.assume_multiple %3, 128 : i32
    %5 = arith.index_cast %4 : i32 to index
    %c0 = arith.constant 0 : index
    %6 = vector.load %arg3[%5, %c0] : memref<128x128xbf16, #tpu.memory_space<vmem>>, vector<128x128xbf16>
    %c0_1 = arith.constant 0 : index
    %c0_2 = arith.constant 0 : index
    %7 = vector.load %arg7[%c0_1, %c0_2] : memref<128x128xf32, #tpu.memory_space<vmem>>, vector<128x128xf32>
    %c0_3 = arith.constant 0 : index
    %c0_4 = arith.constant 0 : index
    %8 = vector.load %arg2[%c0_3, %c0_4] : memref<128x128xbf16, #tpu.memory_space<vmem>>, vector<128x128xbf16>
    %cst = arith.constant dense<0.000000e+00> : vector<128x128xf32>
    %9 = tpu.matmul %8, %6, %cst {dimension_numbers = #tpu.dot_dimension_numbers<[1], [0], [0], [1], [0, 0, 1, 1], [], []>} : vector<128x128xbf16>, vector<128x128xbf16>, vector<128x128xf32> -> vector<128x128xf32>
    %10 = arith.addf %7, %9 : vector<128x128xf32>
    %c0_5 = arith.constant 0 : index
    %c0_6 = arith.constant 0 : index
    %11 = vector.load %arg7[%c0_5, %c0_6] : memref<128x128xf32, #tpu.memory_space<vmem>>, vector<128x128xf32>
    tpu.vector_store %arg7[%c0_5, %c0_6], %10 {strides = array<i32>} : memref<128x128xf32, #tpu.memory_space<vmem>>, vector<128x128xf32>,
    %c0_i32_7 = arith.constant 0 : i32
    %12 = arith.cmpi eq, %arg1, %c0_i32_7 : i32
    %13 = arith.extui %12 : i1 to i32
    %c0_i32_8 = arith.constant 0 : i32
    %14 = arith.cmpi ne, %13, %c0_i32_8 : i32
    scf.if %14 {
      %c0_9 = arith.constant 0 : index
      %c0_10 = arith.constant 0 : index
      %15 = vector.load %arg7[%c0_9, %c0_10] : memref<128x128xf32, #tpu.memory_space<vmem>>, vector<128x128xf32>
      %c0_11 = arith.constant 0 : index
      %c0_12 = arith.constant 0 : index
      %16 = vector.load %arg4[%c0_11, %c0_12] : memref<128x128xf32, #tpu.memory_space<vmem>>, vector<128x128xf32>
      %cst_13 = arith.constant 0.899999976 : f32
      %17 = vector.broadcast %cst_13 : f32 to vector<128x128xf32>
      %18 = arith.mulf %17, %15 : vector<128x128xf32>
      %cst_14 = arith.constant 1.000000e-01 : f32
      %19 = vector.broadcast %cst_14 : f32 to vector<128x128xf32>
      %20 = arith.mulf %19, %16 : vector<128x128xf32>
      %21 = arith.addf %18, %20 : vector<128x128xf32>
      %22 = arith.truncf %21 : vector<128x128xf32> to vector<128x128xbf16>
      %c0_15 = arith.constant 0 : index
      %c0_16 = arith.constant 0 : index
      %23 = vector.load %arg5[%c0_15, %c0_16] : memref<128x128xbf16, #tpu.memory_space<vmem>>, vector<128x128xbf16>
      %cst_17 = arith.constant dense<0.000000e+00> : vector<128x128xf32>
      %24 = tpu.matmul %22, %23, %cst_17 {dimension_numbers = #tpu.dot_dimension_numbers<[1], [0], [0], [1], [0, 0, 1, 1], [], []>} : vector<128x128xbf16>, vector<128x128xbf16>, vector<128x128xf32> -> vector<128x128xf32>
      %cst_18 = arith.constant 0.776856422 : f32
      %25 = vector.broadcast %cst_18 : f32 to vector<128x128xf32>
      %26 = arith.mulf %25, %21 : vector<128x128xf32>
      %27 = arith.addf %24, %26 : vector<128x128xf32>
      %cst_19 = arith.constant 0.000000e+00 : f32
      %28 = vector.broadcast %cst_19 : f32 to vector<128x128xf32>
      %29 = arith.maximumf %27, %28 : vector<128x128xf32>
      %c0_20 = arith.constant 0 : index
      %c0_21 = arith.constant 0 : index
      %30 = vector.load %arg6[%c0_20, %c0_21] : memref<128x128xf32, #tpu.memory_space<vmem>>, vector<128x128xf32>
      tpu.vector_store %arg6[%c0_20, %c0_21], %29 {strides = array<i32>} : memref<128x128xf32, #tpu.memory_space<vmem>>, vector<128x128xf32>,
    } else {
    }
    return
  }
  func.func @transform_0(%arg0: i32, %arg1: i32) -> (i32, i32) {
    %c0_i32 = arith.constant 0 : i32
    return %arg0, %arg1 : i32, i32
  }
  func.func @transform_1(%arg0: i32, %arg1: i32) -> (i32, i32) {
    %c0_i32 = arith.constant 0 : i32
    %c0_i32_0 = arith.constant 0 : i32
    %c0_i32_1 = arith.constant 0 : i32
    return %c0_i32, %c0_i32_0 : i32, i32
  }
  func.func @transform_2(%arg0: i32, %arg1: i32) -> (i32, i32) {
    %c0_i32 = arith.constant 0 : i32
    %c0_i32_0 = arith.constant 0 : i32
    return %arg0, %c0_i32 : i32, i32
  }
  func.func @transform_3(%arg0: i32, %arg1: i32) -> (i32, i32) {
    %c0_i32 = arith.constant 0 : i32
    %c0_i32_0 = arith.constant 0 : i32
    %c0_i32_1 = arith.constant 0 : i32
    return %c0_i32, %c0_i32_0 : i32, i32
  }
  func.func @transform_4(%arg0: i32, %arg1: i32) -> (i32, i32) {
    %c0_i32 = arith.constant 0 : i32
    %c0_i32_0 = arith.constant 0 : i32
    return %arg0, %c0_i32 : i32, i32
  }
}

module attributes {stable_mosaic.version = 11 : i64} {
  func.func @_linear_kernel(%arg0: i32, %arg1: memref<128x128xf32, #tpu.memory_space<vmem>>, %arg2: memref<128x128xf32, #tpu.memory_space<vmem>>, %arg3: memref<1x128xf32, #tpu.memory_space<vmem>>, %arg4: memref<128x128xf32, #tpu.memory_space<vmem>>) attributes {dimension_semantics = [#tpu.dimension_semantics<parallel>], iteration_bounds = array<i64: 1>, scalar_prefetch = 0 : i64, scratch_operands = 0 : i64, tpu.core_type = #tpu.core_type<tc>, window_params = [{transform_indices = @transform_0, window_bounds = array<i64: 128, 128>}, {pipeline_mode = #tpu.pipeline_mode<synchronous>, transform_indices = @transform_1, window_bounds = array<i64: 128, 128>}, {pipeline_mode = #tpu.pipeline_mode<synchronous>, transform_indices = @transform_2, window_bounds = array<i64: 1, 128>}, {transform_indices = @transform_3, window_bounds = array<i64: 128, 128>}]} {
    %c0 = arith.constant 0 : index
    %c0_0 = arith.constant 0 : index
    %0 = vector.load %arg1[%c0, %c0_0] : memref<128x128xf32, #tpu.memory_space<vmem>>, vector<128x128xf32>
    %c0_1 = arith.constant 0 : index
    %c0_2 = arith.constant 0 : index
    %1 = vector.load %arg2[%c0_1, %c0_2] : memref<128x128xf32, #tpu.memory_space<vmem>>, vector<128x128xf32>
    %cst = arith.constant dense<0.000000e+00> : vector<128x128xf32>
    %2 = tpu.matmul %0, %1, %cst {dimension_numbers = #tpu.dot_dimension_numbers<[1], [0], [0], [1], [0, 0, 1, 1], [], []>} : vector<128x128xf32>, vector<128x128xf32>, vector<128x128xf32> -> vector<128x128xf32>
    %c0_3 = arith.constant 0 : index
    %c0_4 = arith.constant 0 : index
    %3 = vector.load %arg3[%c0_3, %c0_4] : memref<1x128xf32, #tpu.memory_space<vmem>>, vector<1x128xf32>
    %4 = vector.broadcast %3 : vector<1x128xf32> to vector<128x128xf32>
    %5 = arith.addf %2, %4 : vector<128x128xf32>
    %c0_5 = arith.constant 0 : index
    %c0_6 = arith.constant 0 : index
    %6 = vector.load %arg4[%c0_5, %c0_6] : memref<128x128xf32, #tpu.memory_space<vmem>>, vector<128x128xf32>
    tpu.vector_store %arg4[%c0_5, %c0_6], %5 {strides = array<i32>} : memref<128x128xf32, #tpu.memory_space<vmem>>, vector<128x128xf32>,
    return
  }
  func.func @transform_0(%arg0: i32) -> (i32, i32) {
    %c0_i32 = arith.constant 0 : i32
    %c0_i32_0 = arith.constant 0 : i32
    return %arg0, %c0_i32 : i32, i32
  }
  func.func @transform_1(%arg0: i32) -> (i32, i32) {
    %c0_i32 = arith.constant 0 : i32
    %c0_i32_0 = arith.constant 0 : i32
    %c0_i32_1 = arith.constant 0 : i32
    return %c0_i32, %c0_i32_0 : i32, i32
  }
  func.func @transform_2(%arg0: i32) -> (i32, i32) {
    %c0_i32 = arith.constant 0 : i32
    %c0_i32_0 = arith.constant 0 : i32
    %c0_i32_1 = arith.constant 0 : i32
    return %c0_i32, %c0_i32_0 : i32, i32
  }
  func.func @transform_3(%arg0: i32) -> (i32, i32) {
    %c0_i32 = arith.constant 0 : i32
    %c0_i32_0 = arith.constant 0 : i32
    return %arg0, %c0_i32 : i32, i32
  }
}

</mosaic_0001>

<llo_original>
// kernel: _gcnii_forward_impl.4
$region0: #{_gcnii_forward_impl.4}
  #allocation0 [shape = 'u32[]', space=smem, size = 0x4, offset = 0x4, fixed_abs, tag = 'smem constant byte address 0x4 - core index']
  #allocation1 [shape = 'u32[144,128]{1,0:T(1,128)}', space=vmem, size = 0x12000, scoped, tag = 'internal scratch']
  %s0 = inlined_call_operand.vmem [shape: f32[128,128], index: 0, kind: input, shape index: {}]
  %s1 = inlined_call_operand.vmem [shape: f32[128,128], index: 1, kind: input, shape index: {}]
  %s2 = inlined_call_operand.vmem [shape: f32[1,128], index: 2, kind: input, shape index: {}]
  %s3 = inlined_call_operand.vmem [shape: f32[128,128], index: 3, kind: output, shape index: {0}]
  %s4 = inlined_call_operand.vmem [shape: bf16[128,128], index: 4, kind: output, shape index: {1}]
  %5 = xla_tuple %s3, %s4
  %s6 = sld [smem:[#allocation0]]
  $region30: #{_gcnii_forward_impl.4} parent=0
    _
  %s8 = ssub.s32 1, %s6
  %s9 = scalar_select 0, %s8, %s6
  // Predicated region
  $region2: #{_gcnii_forward_impl.4} parent=0 // pred_check
    _
  $region3: #{_gcnii_forward_impl.4} parent=0 // pred_check_branch
    %11 = sbr.rel (0) target = $region5
  $region4: #{_gcnii_forward_impl.4} parent=0 // pred_region
    _
  $region5: #{_gcnii_forward_impl.4} parent=0 // pred_fallthru
    _
  // Predicated region
  $region6: #{_gcnii_forward_impl.4} parent=0 // pred_check
    _
  $region7: #{_gcnii_forward_impl.4} parent=0 // pred_check_branch
    %13 = sbr.rel (0) target = $region9
  $region8: #{_gcnii_forward_impl.4} parent=0 // pred_region
    _
  $region9: #{_gcnii_forward_impl.4} parent=0 // pred_fallthru
    _
  // Predicated region
  $region10: #{_gcnii_forward_impl.4} parent=0 // pred_check
    _
  $region11: #{_gcnii_forward_impl.4} parent=0 // pred_check_branch
    %15 = sbr.rel (0) target = $region13
  $region12: #{_gcnii_forward_impl.4} parent=0 // pred_region
    _
  $region13: #{_gcnii_forward_impl.4} parent=0 // pred_fallthru
    _
  %v16 = vld [vmem:[%s0] sm:$0xff]
  %v17 = vld [vmem:[%s0 + $0x8] sm:$0xff]
  %v18 = vld [vmem:[%s0 + $0x10] sm:$0xff]
  %v19 = vld [vmem:[%s0 + $0x18] sm:$0xff]
  %v20 = vld [vmem:[%s0 + $0x20] sm:$0xff]
  %v21 = vld [vmem:[%s0 + $0x28] sm:$0xff]
  %v22 = vld [vmem:[%s0 + $0x30] sm:$0xff]
  %v23 = vld [vmem:[%s0 + $0x38] sm:$0xff]
  %v24 = vld [vmem:[%s0 + $0x40] sm:$0xff]
  %v25 = vld [vmem:[%s0 + $0x48] sm:$0xff]
  %v26 = vld [vmem:[%s0 + $0x50] sm:$0xff]
  %v27 = vld [vmem:[%s0 + $0x58] sm:$0xff]
  %v28 = vld [vmem:[%s0 + $0x60] sm:$0xff]
  %v29 = vld [vmem:[%s0 + $0x68] sm:$0xff]
  %v30 = vld [vmem:[%s0 + $0x70] sm:$0xff]
  %v31 = vld [vmem:[%s0 + $0x78] sm:$0xff]
  %v32 = vld [vmem:[%s1] sm:$0xff]
  %v33 = vld [vmem:[%s1 + $0x8] sm:$0xff]
  %v34 = vld [vmem:[%s1 + $0x10] sm:$0xff]
  %v35 = vld [vmem:[%s1 + $0x18] sm:$0xff]
  %v36 = vld [vmem:[%s1 + $0x20] sm:$0xff]
  %v37 = vld [vmem:[%s1 + $0x28] sm:$0xff]
  %v38 = vld [vmem:[%s1 + $0x30] sm:$0xff]
  %v39 = vld [vmem:[%s1 + $0x38] sm:$0xff]
  %v40 = vld [vmem:[%s1 + $0x40] sm:$0xff]
  %v41 = vld [vmem:[%s1 + $0x48] sm:$0xff]
  %v42 = vld [vmem:[%s1 + $0x50] sm:$0xff]
  %v43 = vld [vmem:[%s1 + $0x58] sm:$0xff]
  %v44 = vld [vmem:[%s1 + $0x60] sm:$0xff]
  %v45 = vld [vmem:[%s1 + $0x68] sm:$0xff]
  %v46 = vld [vmem:[%s1 + $0x70] sm:$0xff]
  %v47 = vld [vmem:[%s1 + $0x78] sm:$0xff]
  %v48 = vld [vmem:[%s2] sm:$0x1]
  %v50 = vlaneseq
  %v51 = vshrl.u32 %v50, 7
  %v52 = vsub.s32 0, %v51
  %v53 = vrot.slane %v48, %v52
  %55 = vmatprep.subr.mxu0 0.0
  %56 = vmatpush1.msra.mxu0 %v32
  %57 = vmatprep.subr.mxu0 0.0
  %58 = vmatpush1.msra.mxu0 %v33
  %59 = vmatprep.subr.mxu0 0.0
  %60 = vmatpush1.msra.mxu0 %v34
  %61 = vmatprep.subr.mxu0 0.0
  %62 = vmatpush1.msra.mxu0 %v35
  %63 = vmatprep.subr.mxu0 0.0
  %64 = vmatpush1.msra.mxu0 %v36
  %65 = vmatprep.subr.mxu0 0.0
  %66 = vmatpush1.msra.mxu0 %v37
  %67 = vmatprep.subr.mxu0 0.0
  %68 = vmatpush1.msra.mxu0 %v38
  %69 = vmatprep.subr.mxu0 0.0
  %70 = vmatpush1.msra.mxu0 %v39
  %71 = vmatprep.subr.mxu0 0.0
  %72 = vmatpush1.msra.mxu0 %v40
  %73 = vmatprep.subr.mxu0 0.0
  %74 = vmatpush1.msra.mxu0 %v41
  %75 = vmatprep.subr.mxu0 0.0
  %76 = vmatpush1.msra.mxu0 %v42
  %77 = vmatprep.subr.mxu0 0.0
  %78 = vmatpush1.msra.mxu0 %v43
  %79 = vmatprep.subr.mxu0 0.0
  %80 = vmatpush1.msra.mxu0 %v44
  %81 = vmatprep.subr.mxu0 0.0
  %82 = vmatpush1.msra.mxu0 %v45
  %83 = vmatprep.subr.mxu0 0.0
  %84 = vmatpush1.msra.mxu0 %v46
  %85 = vmatprep.subr.mxu0 0.0
  %86 = vmatpush1.msra.mxu0 %v47
  %87 = vmatprep.subr.mxu0 0.0
  %88 = vmatpush1.msra.mxu0 0.0
  %89 = vmatprep.subr.mxu0 0.0
  %90 = vmatpush1.msra.mxu0 0.0
  %91 = vmatprep.subr.mxu0 0.0
  %92 = vmatpush1.msra.mxu0 0.0
  %93 = vmatprep.subr.mxu0 0.0
  %94 = vmatpush1.msra.mxu0 0.0
  %95 = vmatprep.subr.mxu0 0.0
  %96 = vmatpush1.msra.mxu0 0.0
  %97 = vmatprep.subr.mxu0 0.0
  %98 = vmatpush1.msra.mxu0 0.0
  %99 = vmatprep.subr.mxu0 0.0
  %100 = vmatpush1.msra.mxu0 0.0
  %101 = vmatprep.subr.mxu0 0.0
  %102 = vmatpush1.msra.mxu0 0.0
  %103 = vmatprep.subr.mxu0 0.0
  %104 = vmatpush1.msra.mxu0 0.0
  %105 = vmatprep.subr.mxu0 0.0
  %106 = vmatpush1.msra.mxu0 0.0
  %107 = vmatprep.subr.mxu0 0.0
  %108 = vmatpush1.msra.mxu0 0.0
  %109 = vmatprep.subr.mxu0 0.0
  %110 = vmatpush1.msra.mxu0 0.0
  %111 = vmatprep.subr.mxu0 0.0
  %112 = vmatpush1.msra.mxu0 0.0
  %113 = vmatprep.subr.mxu0 0.0
  %114 = vmatpush1.msra.mxu0 0.0
  %115 = vmatprep.subr.mxu0 0.0
  %116 = vmatpush1.msra.mxu0 0.0
  %117 = vmatprep.subr.mxu0 0.0
  %118 = vmatpush1.msra.mxu0 0.0
  %119 = vmatprep.mubr.f32.mxu0 0.0
  %120 = vmatmul.mubr.f32.gmra.mrb[0].mxu0 %v16
  %v121 = vpop.f32.mrb[0].mxu0
  %v122 = vadd.f32 %v53, %v121
  %v123 = vpop.f32.mrb[0].mxu0
  %124 = vmatprep.mubr.f32.mxu0 0.0
  %125 = vmatmul.mubr.f32.gmra.mrb[0].mxu0 %v17
  %v126 = vpop.f32.mrb[0].mxu0
  %v127 = vadd.f32 %v53, %v126
  %v128 = vpop.f32.mrb[0].mxu0
  %129 = vmatprep.mubr.f32.mxu0 0.0
  %130 = vmatmul.mubr.f32.gmra.mrb[0].mxu0 %v18
  %v131 = vpop.f32.mrb[0].mxu0
  %v132 = vadd.f32 %v53, %v131
  %v133 = vpop.f32.mrb[0].mxu0
  %134 = vmatprep.mubr.f32.mxu0 0.0
  %135 = vmatmul.mubr.f32.gmra.mrb[0].mxu0 %v19
  %v136 = vpop.f32.mrb[0].mxu0
  %v137 = vadd.f32 %v53, %v136
  %v138 = vpop.f32.mrb[0].mxu0
  %139 = vmatprep.mubr.f32.mxu0 0.0
  %140 = vmatmul.mubr.f32.gmra.mrb[0].mxu0 %v20
  %v141 = vpop.f32.mrb[0].mxu0
  %v142 = vadd.f32 %v53, %v141
  %v143 = vpop.f32.mrb[0].mxu0
  %144 = vmatprep.mubr.f32.mxu0 0.0
  %145 = vmatmul.mubr.f32.gmra.mrb[0].mxu0 %v21
  %v146 = vpop.f32.mrb[0].mxu0
  %v147 = vadd.f32 %v53, %v146
  %v148 = vpop.f32.mrb[0].mxu0
  %149 = vmatprep.mubr.f32.mxu0 0.0
  %150 = vmatmul.mubr.f32.gmra.mrb[0].mxu0 %v22
  %v151 = vpop.f32.mrb[0].mxu0
  %v152 = vadd.f32 %v53, %v151
  %v153 = vpop.f32.mrb[0].mxu0
  %154 = vmatprep.mubr.f32.mxu0 0.0
  %155 = vmatmul.mubr.f32.gmra.mrb[0].mxu0 %v23
  %v156 = vpop.f32.mrb[0].mxu0
  %v157 = vadd.f32 %v53, %v156
  %v158 = vpop.f32.mrb[0].mxu0
  %159 = vmatprep.mubr.f32.mxu0 0.0
  %160 = vmatmul.mubr.f32.gmra.mrb[0].mxu0 %v24
  %v161 = vpop.f32.mrb[0].mxu0
  %v162 = vadd.f32 %v53, %v161
  %v163 = vpop.f32.mrb[0].mxu0
  %164 = vmatprep.mubr.f32.mxu0 0.0
  %165 = vmatmul.mubr.f32.gmra.mrb[0].mxu0 %v25
  %v166 = vpop.f32.mrb[0].mxu0
  %v167 = vadd.f32 %v53, %v166
  %v168 = vpop.f32.mrb[0].mxu0
  %169 = vmatprep.mubr.f32.mxu0 0.0
  %170 = vmatmul.mubr.f32.gmra.mrb[0].mxu0 %v26
  %v171 = vpop.f32.mrb[0].mxu0
  %v172 = vadd.f32 %v53, %v171
  %v173 = vpop.f32.mrb[0].mxu0
  %174 = vmatprep.mubr.f32.mxu0 0.0
  %175 = vmatmul.mubr.f32.gmra.mrb[0].mxu0 %v27
  %v176 = vpop.f32.mrb[0].mxu0
  %v177 = vadd.f32 %v53, %v176
  %v178 = vpop.f32.mrb[0].mxu0
  %179 = vmatprep.mubr.f32.mxu0 0.0
  %180 = vmatmul.mubr.f32.gmra.mrb[0].mxu0 %v28
  %v181 = vpop.f32.mrb[0].mxu0
  %v182 = vadd.f32 %v53, %v181
  %v183 = vpop.f32.mrb[0].mxu0
  %184 = vmatprep.mubr.f32.mxu0 0.0
  %185 = vmatmul.mubr.f32.gmra.mrb[0].mxu0 %v29
  %v186 = vpop.f32.mrb[0].mxu0
  %v187 = vadd.f32 %v53, %v186
  %v188 = vpop.f32.mrb[0].mxu0
  %189 = vmatprep.mubr.f32.mxu0 0.0
  %190 = vmatmul.mubr.f32.gmra.mrb[0].mxu0 %v30
  %v191 = vpop.f32.mrb[0].mxu0
  %v192 = vadd.f32 %v53, %v191
  %v193 = vpop.f32.mrb[0].mxu0
  %194 = vmatprep.mubr.f32.mxu0 0.0
  %195 = vmatmul.mubr.f32.gmra.mrb[0].mxu0 %v31
  %v196 = vpop.f32.mrb[0].mxu0
  %v197 = vadd.f32 %v53, %v196
  %v198 = vpop.f32.mrb[0].mxu0
  %199 = vdwg.mxu0
  %v200 = vmax.f32 %v122, 0.0
  %v201 = vmax.f32 %v127, 0.0
  %v202 = vmax.f32 %v132, 0.0
  %v203 = vmax.f32 %v137, 0.0
  %v204 = vmax.f32 %v142, 0.0
  %v205 = vmax.f32 %v147, 0.0
  %v206 = vmax.f32 %v152, 0.0
  %v207 = vmax.f32 %v157, 0.0
  %v208 = vmax.f32 %v162, 0.0
  %v209 = vmax.f32 %v167, 0.0
  %v210 = vmax.f32 %v172, 0.0
  %v211 = vmax.f32 %v177, 0.0
  %v212 = vmax.f32 %v182, 0.0
  %v213 = vmax.f32 %v187, 0.0
  %v214 = vmax.f32 %v192, 0.0
  %v215 = vmax.f32 %v197, 0.0
  %s216 = smul.u32 0, 128
  %v217 = vlaneseq
  %v218 = vshrl.u32 %v217, 7
  %v219 = vadd.s32 %v218, 8
  %v220 = vadd.s32 %v218, 16
  %v221 = vadd.s32 %v218, 24
  %v222 = vadd.s32 %v218, 32
  %v223 = vadd.s32 %v218, 40
  %v224 = vadd.s32 %v218, 48
  %v225 = vadd.s32 %v218, 56
  %v226 = vadd.s32 %v218, 64
  %v227 = vadd.s32 %v218, 72
  %v228 = vadd.s32 %v218, 80
  %v229 = vadd.s32 %v218, 88
  %v230 = vadd.s32 %v218, 96
  %v231 = vadd.s32 %v218, 104
  %v232 = vadd.s32 %v218, 112
  %v233 = vadd.s32 %v218, 120
  %v234 = vstv %s216
  %v235 = vadd.s32 %v234, %v218
  %v236 = vadd.s32 %v234, %v219
  %v237 = vadd.s32 %v234, %v220
  %v238 = vadd.s32 %v234, %v221
  %v239 = vadd.s32 %v234, %v222
  %v240 = vadd.s32 %v234, %v223
  %v241 = vadd.s32 %v234, %v224
  %v242 = vadd.s32 %v234, %v225
  %v243 = vadd.s32 %v234, %v226
  %v244 = vadd.s32 %v234, %v227
  %v245 = vadd.s32 %v234, %v228
  %v246 = vadd.s32 %v234, %v229
  %v247 = vadd.s32 %v234, %v230
  %v248 = vadd.s32 %v234, %v231
  %v249 = vadd.s32 %v234, %v232
  %v250 = vadd.s32 %v234, %v233
  %vm251 = vcmp.lt.s32.totalorder %v235, 64
  %vm252 = vcmp.lt.s32.totalorder %v236, 64
  %vm253 = vcmp.lt.s32.totalorder %v237, 64
  %vm254 = vcmp.lt.s32.totalorder %v238, 64
  %vm255 = vcmp.lt.s32.totalorder %v239, 64
  %vm256 = vcmp.lt.s32.totalorder %v240, 64
  %vm257 = vcmp.lt.s32.totalorder %v241, 64
  %vm258 = vcmp.lt.s32.totalorder %v242, 64
  %vm259 = vcmp.lt.s32.totalorder %v243, 64
  %vm260 = vcmp.lt.s32.totalorder %v244, 64
  %vm261 = vcmp.lt.s32.totalorder %v245, 64
  %vm262 = vcmp.lt.s32.totalorder %v246, 64
  %vm263 = vcmp.lt.s32.totalorder %v247, 64
  %vm264 = vcmp.lt.s32.totalorder %v248, 64
  %vm265 = vcmp.lt.s32.totalorder %v249, 64
  %vm266 = vcmp.lt.s32.totalorder %v250, 64
  %v267 = vsel %vm251, %v200, 0.0
  %v268 = vsel %vm252, %v201, 0.0
  %v269 = vsel %vm253, %v202, 0.0
  %v270 = vsel %vm254, %v203, 0.0
  %v271 = vsel %vm255, %v204, 0.0
  %v272 = vsel %vm256, %v205, 0.0
  %v273 = vsel %vm257, %v206, 0.0
  %v274 = vsel %vm258, %v207, 0.0
  %v275 = vsel %vm259, %v208, 0.0
  %v276 = vsel %vm260, %v209, 0.0
  %v277 = vsel %vm261, %v210, 0.0
  %v278 = vsel %vm262, %v211, 0.0
  %v279 = vsel %vm263, %v212, 0.0
  %v280 = vsel %vm264, %v213, 0.0
  %v281 = vsel %vm265, %v214, 0.0
  %v282 = vsel %vm266, %v215, 0.0
  %283 = vst [vmem:[%s3] sm:$0xff] %v267
  %284 = vst [vmem:[%s3 + $0x8] sm:$0xff] %v268
  %285 = vst [vmem:[%s3 + $0x10] sm:$0xff] %v269
  %286 = vst [vmem:[%s3 + $0x18] sm:$0xff] %v270
  %287 = vst [vmem:[%s3 + $0x20] sm:$0xff] %v271
  %288 = vst [vmem:[%s3 + $0x28] sm:$0xff] %v272
  %289 = vst [vmem:[%s3 + $0x30] sm:$0xff] %v273
  %290 = vst [vmem:[%s3 + $0x38] sm:$0xff] %v274
  %291 = vst [vmem:[%s3 + $0x40] sm:$0xff] %v275
  %292 = vst [vmem:[%s3 + $0x48] sm:$0xff] %v276
  %293 = vst [vmem:[%s3 + $0x50] sm:$0xff] %v277
  %294 = vst [vmem:[%s3 + $0x58] sm:$0xff] %v278
  %295 = vst [vmem:[%s3 + $0x60] sm:$0xff] %v279
  %296 = vst [vmem:[%s3 + $0x68] sm:$0xff] %v280
  %297 = vst [vmem:[%s3 + $0x70] sm:$0xff] %v281
  %298 = vst [vmem:[%s3 + $0x78] sm:$0xff] %v282
  %v299 = vpack.c.bf16 %v268, %v267
  %v300 = vpack.c.bf16 %v270, %v269
  %v301 = vpack.c.bf16 %v272, %v271
  %v302 = vpack.c.bf16 %v274, %v273
  %v303 = vpack.c.bf16 %v276, %v275
  %v304 = vpack.c.bf16 %v278, %v277
  %v305 = vpack.c.bf16 %v280, %v279
  %v306 = vpack.c.bf16 %v282, %v281
  %v315 = vunpack.c.l.b16 %v299
  %v316 = vunpack.c.h.b16 %v299
  %v317 = vunpack.c.l.b16 %v300
  %v318 = vunpack.c.h.b16 %v300
  %v319 = vunpack.c.l.b16 %v301
  %v320 = vunpack.c.h.b16 %v301
  %v321 = vunpack.c.l.b16 %v302
  %v322 = vunpack.c.h.b16 %v302
  %v323 = vunpack.c.l.b16 %v303
  %v324 = vunpack.c.h.b16 %v303
  %v325 = vunpack.c.l.b16 %v304
  %v326 = vunpack.c.h.b16 %v304
  %v327 = vunpack.c.l.b16 %v305
  %v328 = vunpack.c.h.b16 %v305
  %v329 = vunpack.c.l.b16 %v306
  %v330 = vunpack.c.h.b16 %v306
  %v331 = vpack.c.b16 %v315, %v315
  %v332 = vpack.c.b16 %v316, %v316
  %v333 = vpack.c.b16 %v317, %v317
  %v334 = vpack.c.b16 %v318, %v318
  %v335 = vpack.c.b16 %v319, %v319
  %v336 = vpack.c.b16 %v320, %v320
  %v337 = vpack.c.b16 %v321, %v321
  %v338 = vpack.c.b16 %v322, %v322
  %v339 = vpack.c.b16 %v323, %v323
  %v340 = vpack.c.b16 %v324, %v324
  %v341 = vpack.c.b16 %v325, %v325
  %v342 = vpack.c.b16 %v326, %v326
  %v343 = vpack.c.b16 %v327, %v327
  %v344 = vpack.c.b16 %v328, %v328
  %v345 = vpack.c.b16 %v329, %v329
  %v346 = vpack.c.b16 %v330, %v330
  %363 = vst [vmem:[%s4] sm:$0xf] %v331
  %364 = vst [vmem:[%s4 + $0x4] sm:$0xf] %v332
  %365 = vst [vmem:[%s4 + $0x8] sm:$0xf] %v333
  %366 = vst [vmem:[%s4 + $0xc] sm:$0xf] %v334
  %367 = vst [vmem:[%s4 + $0x10] sm:$0xf] %v335
  %368 = vst [vmem:[%s4 + $0x14] sm:$0xf] %v336
  %369 = vst [vmem:[%s4 + $0x18] sm:$0xf] %v337
  %370 = vst [vmem:[%s4 + $0x1c] sm:$0xf] %v338
  %371 = vst [vmem:[%s4 + $0x20] sm:$0xf] %v339
  %372 = vst [vmem:[%s4 + $0x24] sm:$0xf] %v340
  %373 = vst [vmem:[%s4 + $0x28] sm:$0xf] %v341
  %374 = vst [vmem:[%s4 + $0x2c] sm:$0xf] %v342
  %375 = vst [vmem:[%s4 + $0x30] sm:$0xf] %v343
  %376 = vst [vmem:[%s4 + $0x34] sm:$0xf] %v344
  %377 = vst [vmem:[%s4 + $0x38] sm:$0xf] %v345
  %378 = vst [vmem:[%s4 + $0x3c] sm:$0xf] %v346
  // Predicated region
  $region14: #{_gcnii_forward_impl.4} parent=0 // pred_check
    _
  $region15: #{_gcnii_forward_impl.4} parent=0 // pred_check_branch
    %380 = sbr.rel (0) target = $region17
  $region16: #{_gcnii_forward_impl.4} parent=0 // pred_region
    _
  $region17: #{_gcnii_forward_impl.4} parent=0 // pred_fallthru
    _
  // Predicated region
  $region18: #{_gcnii_forward_impl.4} parent=0 // pred_check
    _
  $region19: #{_gcnii_forward_impl.4} parent=0 // pred_check_branch
    %382 = sbr.rel (0) target = $region21
  $region20: #{_gcnii_forward_impl.4} parent=0 // pred_region
    _
  $region21: #{_gcnii_forward_impl.4} parent=0 // pred_fallthru
    _
  // Predicated region
  $region22: #{_gcnii_forward_impl.4} parent=0 // pred_check
    _
  $region23: #{_gcnii_forward_impl.4} parent=0 // pred_check_branch
    %384 = sbr.rel (0) target = $region25
  $region24: #{_gcnii_forward_impl.4} parent=0 // pred_region
    _
  $region25: #{_gcnii_forward_impl.4} parent=0 // pred_fallthru
    _
  // Predicated region
  $region26: #{_gcnii_forward_impl.4} parent=0 // pred_check
    _
  $region27: #{_gcnii_forward_impl.4} parent=0 // pred_check_branch
    %386 = sbr.rel (0) target = $region29
  $region28: #{_gcnii_forward_impl.4} parent=0 // pred_region
    _
  $region29: #{_gcnii_forward_impl.4} parent=0 // pred_fallthru
    _

// kernel: _gcnii_forward_impl.6
$region0: #{_gcnii_forward_impl.6}
  #allocation0 [shape = 'u32[]', space=smem, size = 0x4, offset = 0x4, fixed_abs, tag = 'smem constant byte address 0x4 - core index']
  #allocation1 [shape = 'u32[144,128]{1,0:T(1,128)}', space=vmem, size = 0x12000, scoped, tag = 'internal scratch']
  #allocation2 [shape = 'f32[128,128]{1,0:T(8,128)}', space=vmem, size = 0x10000, scoped, tag = 'scratch operand']
  %s0 = inlined_call_operand.vmem [shape: bf16[128,128], index: 0, kind: input, shape index: {}]
  %s1 = inlined_call_operand.vmem [shape: bf16[128,128], index: 1, kind: input, shape index: {}]
  %s2 = inlined_call_operand.vmem [shape: f32[128,128], index: 2, kind: input, shape index: {}]
  %s3 = inlined_call_operand.vmem [shape: bf16[128,128], index: 3, kind: input, shape index: {}]
  %s4 = inlined_call_operand.vmem [shape: f32[128,128], index: 4, kind: output, shape index: {}]
  %s5 = sld [smem:[#allocation0]]
  $region34: #{_gcnii_forward_impl.6} parent=0
    _
  %s7 = ssub.s32 1, %s5
  %s8 = scalar_select 0, %s7, %s5
  // Predicated region
  $region2: #{_gcnii_forward_impl.6} parent=0 // pred_check
    _
  $region3: #{_gcnii_forward_impl.6} parent=0 // pred_check_branch
    %10 = sbr.rel (0) target = $region5
  $region4: #{_gcnii_forward_impl.6} parent=0 // pred_region
    _
  $region5: #{_gcnii_forward_impl.6} parent=0 // pred_fallthru
    _
  // Predicated region
  $region6: #{_gcnii_forward_impl.6} parent=0 // pred_check
    _
  $region7: #{_gcnii_forward_impl.6} parent=0 // pred_check_branch
    %12 = sbr.rel (0) target = $region9
  $region8: #{_gcnii_forward_impl.6} parent=0 // pred_region
    _
  $region9: #{_gcnii_forward_impl.6} parent=0 // pred_fallthru
    _
  // Predicated region
  $region10: #{_gcnii_forward_impl.6} parent=0 // pred_check
    _
  $region11: #{_gcnii_forward_impl.6} parent=0 // pred_check_branch
    %14 = sbr.rel (0) target = $region13
  $region12: #{_gcnii_forward_impl.6} parent=0 // pred_region
    _
  $region13: #{_gcnii_forward_impl.6} parent=0 // pred_fallthru
    _
  // Predicated region
  $region14: #{_gcnii_forward_impl.6} parent=0 // pred_check
    _
  $region15: #{_gcnii_forward_impl.6} parent=0 // pred_check_branch
    %16 = sbr.rel (0) target = $region17
  $region16: #{_gcnii_forward_impl.6} parent=0 // pred_region
    _
  $region17: #{_gcnii_forward_impl.6} parent=0 // pred_fallthru
    _
  %p18 = scmp.eq.s32.totalorder 0, 0
  // Predicated region
  $region18: #{_gcnii_forward_impl.6} parent=0 // pred_check
    %p19 = pneg %p18
  $region19: #{_gcnii_forward_impl.6} parent=0 // pred_check_branch
    %21 = sbr.rel (%p19) target = $region21
  $region20: #{_gcnii_forward_impl.6} parent=0 // pred_region
    %22 = vst [vmem:[#allocation2] sm:$0xff] 0.0
    %23 = vst [vmem:[#allocation2 + $0x8] sm:$0xff] 0.0
    %24 = vst [vmem:[#allocation2 + $0x10] sm:$0xff] 0.0
    %25 = vst [vmem:[#allocation2 + $0x18] sm:$0xff] 0.0
    %26 = vst [vmem:[#allocation2 + $0x20] sm:$0xff] 0.0
    %27 = vst [vmem:[#allocation2 + $0x28] sm:$0xff] 0.0
    %28 = vst [vmem:[#allocation2 + $0x30] sm:$0xff] 0.0
    %29 = vst [vmem:[#allocation2 + $0x38] sm:$0xff] 0.0
    %30 = vst [vmem:[#allocation2 + $0x40] sm:$0xff] 0.0
    %31 = vst [vmem:[#allocation2 + $0x48] sm:$0xff] 0.0
    %32 = vst [vmem:[#allocation2 + $0x50] sm:$0xff] 0.0
    %33 = vst [vmem:[#allocation2 + $0x58] sm:$0xff] 0.0
    %34 = vst [vmem:[#allocation2 + $0x60] sm:$0xff] 0.0
    %35 = vst [vmem:[#allocation2 + $0x68] sm:$0xff] 0.0
    %36 = vst [vmem:[#allocation2 + $0x70] sm:$0xff] 0.0
    %37 = vst [vmem:[#allocation2 + $0x78] sm:$0xff] 0.0
  $region21: #{_gcnii_forward_impl.6} parent=0 // pred_fallthru
    _
  %s38 = smul.u32 0, 128
  %s39 = sshra.s32 %s38, 3
  %s40 = sand.u32 %s38, 7
  %s41 = smul.addr %s39, 4
  %s42 = scalar_lea.vmem %s1, %s41
  %v43 = vld [vmem:[%s42] sm:$0xf]
  %v44 = vld [vmem:[%s42 + $0x4] sm:$0xf]
  %v45 = vld [vmem:[%s42 + $0x8] sm:$0xf]
  %v46 = vld [vmem:[%s42 + $0xc] sm:$0xf]
  %v47 = vld [vmem:[%s42 + $0x10] sm:$0xf]
  %v48 = vld [vmem:[%s42 + $0x14] sm:$0xf]
  %v49 = vld [vmem:[%s42 + $0x18] sm:$0xf]
  %v50 = vld [vmem:[%s42 + $0x1c] sm:$0xf]
  %v51 = vld [vmem:[%s42 + $0x20] sm:$0xf]
  %v52 = vld [vmem:[%s42 + $0x24] sm:$0xf]
  %v53 = vld [vmem:[%s42 + $0x28] sm:$0xf]
  %v54 = vld [vmem:[%s42 + $0x2c] sm:$0xf]
  %v55 = vld [vmem:[%s42 + $0x30] sm:$0xf]
  %v56 = vld [vmem:[%s42 + $0x34] sm:$0xf]
  %v57 = vld [vmem:[%s42 + $0x38] sm:$0xf]
  %v58 = vld [vmem:[%s42 + $0x3c] sm:$0xf]
  %v59 = vld [vmem:[#allocation2] sm:$0xff]
  %v60 = vld [vmem:[#allocation2 + $0x8] sm:$0xff]
  %v61 = vld [vmem:[#allocation2 + $0x10] sm:$0xff]
  %v62 = vld [vmem:[#allocation2 + $0x18] sm:$0xff]
  %v63 = vld [vmem:[#allocation2 + $0x20] sm:$0xff]
  %v64 = vld [vmem:[#allocation2 + $0x28] sm:$0xff]
  %v65 = vld [vmem:[#allocation2 + $0x30] sm:$0xff]
  %v66 = vld [vmem:[#allocation2 + $0x38] sm:$0xff]
  %v67 = vld [vmem:[#allocation2 + $0x40] sm:$0xff]
  %v68 = vld [vmem:[#allocation2 + $0x48] sm:$0xff]
  %v69 = vld [vmem:[#allocation2 + $0x50] sm:$0xff]
  %v70 = vld [vmem:[#allocation2 + $0x58] sm:$0xff]
  %v71 = vld [vmem:[#allocation2 + $0x60] sm:$0xff]
  %v72 = vld [vmem:[#allocation2 + $0x68] sm:$0xff]
  %v73 = vld [vmem:[#allocation2 + $0x70] sm:$0xff]
  %v74 = vld [vmem:[#allocation2 + $0x78] sm:$0xff]
  %v75 = vld [vmem:[%s0] sm:$0xf]
  %v76 = vld [vmem:[%s0 + $0x4] sm:$0xf]
  %v77 = vld [vmem:[%s0 + $0x8] sm:$0xf]
  %v78 = vld [vmem:[%s0 + $0xc] sm:$0xf]
  %v79 = vld [vmem:[%s0 + $0x10] sm:$0xf]
  %v80 = vld [vmem:[%s0 + $0x14] sm:$0xf]
  %v81 = vld [vmem:[%s0 + $0x18] sm:$0xf]
  %v82 = vld [vmem:[%s0 + $0x1c] sm:$0xf]
  %v83 = vld [vmem:[%s0 + $0x20] sm:$0xf]
  %v84 = vld [vmem:[%s0 + $0x24] sm:$0xf]
  %v85 = vld [vmem:[%s0 + $0x28] sm:$0xf]
  %v86 = vld [vmem:[%s0 + $0x2c] sm:$0xf]
  %v87 = vld [vmem:[%s0 + $0x30] sm:$0xf]
  %v88 = vld [vmem:[%s0 + $0x34] sm:$0xf]
  %v89 = vld [vmem:[%s0 + $0x38] sm:$0xf]
  %v90 = vld [vmem:[%s0 + $0x3c] sm:$0xf]
  %v107 = vunpack.c.l.b16 %v75
  %v108 = vunpack.c.l.b16 %v76
  %v109 = vunpack.c.l.b16 %v77
  %v110 = vunpack.c.l.b16 %v78
  %v111 = vunpack.c.l.b16 %v79
  %v112 = vunpack.c.l.b16 %v80
  %v113 = vunpack.c.l.b16 %v81
  %v114 = vunpack.c.l.b16 %v82
  %v115 = vunpack.c.l.b16 %v83
  %v116 = vunpack.c.l.b16 %v84
  %v117 = vunpack.c.l.b16 %v85
  %v118 = vunpack.c.l.b16 %v86
  %v119 = vunpack.c.l.b16 %v87
  %v120 = vunpack.c.l.b16 %v88
  %v121 = vunpack.c.l.b16 %v89
  %v122 = vunpack.c.l.b16 %v90
  %v123 = vpack.c.b16 %v108, %v107
  %v124 = vpack.c.b16 %v110, %v109
  %v125 = vpack.c.b16 %v112, %v111
  %v126 = vpack.c.b16 %v114, %v113
  %v127 = vpack.c.b16 %v116, %v115
  %v128 = vpack.c.b16 %v118, %v117
  %v129 = vpack.c.b16 %v120, %v119
  %v130 = vpack.c.b16 %v122, %v121
  %v155 = vunpack.c.l.b16 %v43
  %v156 = vunpack.c.l.b16 %v44
  %v157 = vunpack.c.l.b16 %v45
  %v158 = vunpack.c.l.b16 %v46
  %v159 = vunpack.c.l.b16 %v47
  %v160 = vunpack.c.l.b16 %v48
  %v161 = vunpack.c.l.b16 %v49
  %v162 = vunpack.c.l.b16 %v50
  %v163 = vunpack.c.l.b16 %v51
  %v164 = vunpack.c.l.b16 %v52
  %v165 = vunpack.c.l.b16 %v53
  %v166 = vunpack.c.l.b16 %v54
  %v167 = vunpack.c.l.b16 %v55
  %v168 = vunpack.c.l.b16 %v56
  %v169 = vunpack.c.l.b16 %v57
  %v170 = vunpack.c.l.b16 %v58
  %v171 = vpack.c.b16 %v156, %v155
  %v172 = vpack.c.b16 %v158, %v157
  %v173 = vpack.c.b16 %v160, %v159
  %v174 = vpack.c.b16 %v162, %v161
  %v175 = vpack.c.b16 %v164, %v163
  %v176 = vpack.c.b16 %v166, %v165
  %v177 = vpack.c.b16 %v168, %v167
  %v178 = vpack.c.b16 %v170, %v169
  %187 = vmatprep.subr.bf16.mxu0 0
  %188 = vmatpush1.bf16.msra.mxu0 %v171
  %189 = vmatprep.subr.bf16.mxu0 0
  %190 = vmatpush1.bf16.msra.mxu0 %v172
  %191 = vmatprep.subr.bf16.mxu0 0
  %192 = vmatpush1.bf16.msra.mxu0 %v173
  %193 = vmatprep.subr.bf16.mxu0 0
  %194 = vmatpush1.bf16.msra.mxu0 %v174
  %195 = vmatprep.subr.bf16.mxu0 0
  %196 = vmatpush1.bf16.msra.mxu0 %v175
  %197 = vmatprep.subr.bf16.mxu0 0
  %198 = vmatpush1.bf16.msra.mxu0 %v176
  %199 = vmatprep.subr.bf16.mxu0 0
  %200 = vmatpush1.bf16.msra.mxu0 %v177
  %201 = vmatprep.subr.bf16.mxu0 0
  %202 = vmatpush1.bf16.msra.mxu0 %v178
  %203 = vmatprep.subr.bf16.mxu0 0
  %204 = vmatpush1.bf16.msra.mxu0 0
  %205 = vmatprep.subr.bf16.mxu0 0
  %206 = vmatpush1.bf16.msra.mxu0 0
  %207 = vmatprep.subr.bf16.mxu0 0
  %208 = vmatpush1.bf16.msra.mxu0 0
  %209 = vmatprep.subr.bf16.mxu0 0
  %210 = vmatpush1.bf16.msra.mxu0 0
  %211 = vmatprep.subr.bf16.mxu0 0
  %212 = vmatpush1.bf16.msra.mxu0 0
  %213 = vmatprep.subr.bf16.mxu0 0
  %214 = vmatpush1.bf16.msra.mxu0 0
  %215 = vmatprep.subr.bf16.mxu0 0
  %216 = vmatpush1.bf16.msra.mxu0 0
  %217 = vmatprep.subr.bf16.mxu0 0
  %218 = vmatpush1.bf16.msra.mxu0 0
  %219 = vmatprep.mubr.bf16.mxu0 0
  %220 = vmatmul.mubr.bf16.gmra.mrb[0].mxu0 %v123
  %v221 = vpop.f32.mrb[0].mxu0
  %v222 = vadd.f32 0.0, %v221
  %v223 = vpop.f32.mrb[0].mxu0
  %v224 = vpop.f32.mrb[0].mxu0
  %v225 = vadd.f32 0.0, %v224
  %v226 = vpop.f32.mrb[0].mxu0
  %227 = vmatprep.mubr.bf16.mxu0 0
  %228 = vmatmul.mubr.bf16.gmra.mrb[0].mxu0 %v124
  %v229 = vpop.f32.mrb[0].mxu0
  %v230 = vadd.f32 0.0, %v229
  %v231 = vpop.f32.mrb[0].mxu0
  %v232 = vpop.f32.mrb[0].mxu0
  %v233 = vadd.f32 0.0, %v232
  %v234 = vpop.f32.mrb[0].mxu0
  %235 = vmatprep.mubr.bf16.mxu0 0
  %236 = vmatmul.mubr.bf16.gmra.mrb[0].mxu0 %v125
  %v237 = vpop.f32.mrb[0].mxu0
  %v238 = vadd.f32 0.0, %v237
  %v239 = vpop.f32.mrb[0].mxu0
  %v240 = vpop.f32.mrb[0].mxu0
  %v241 = vadd.f32 0.0, %v240
  %v242 = vpop.f32.mrb[0].mxu0
  %243 = vmatprep.mubr.bf16.mxu0 0
  %244 = vmatmul.mubr.bf16.gmra.mrb[0].mxu0 %v126
  %v245 = vpop.f32.mrb[0].mxu0
  %v246 = vadd.f32 0.0, %v245
  %v247 = vpop.f32.mrb[0].mxu0
  %v248 = vpop.f32.mrb[0].mxu0
  %v249 = vadd.f32 0.0, %v248
  %v250 = vpop.f32.mrb[0].mxu0
  %251 = vmatprep.mubr.bf16.mxu0 0
  %252 = vmatmul.mubr.bf16.gmra.mrb[0].mxu0 %v127
  %v253 = vpop.f32.mrb[0].mxu0
  %v254 = vadd.f32 0.0, %v253
  %v255 = vpop.f32.mrb[0].mxu0
  %v256 = vpop.f32.mrb[0].mxu0
  %v257 = vadd.f32 0.0, %v256
  %v258 = vpop.f32.mrb[0].mxu0
  %259 = vmatprep.mubr.bf16.mxu0 0
  %260 = vmatmul.mubr.bf16.gmra.mrb[0].mxu0 %v128
  %v261 = vpop.f32.mrb[0].mxu0
  %v262 = vadd.f32 0.0, %v261
  %v263 = vpop.f32.mrb[0].mxu0
  %v264 = vpop.f32.mrb[0].mxu0
  %v265 = vadd.f32 0.0, %v264
  %v266 = vpop.f32.mrb[0].mxu0
  %267 = vmatprep.mubr.bf16.mxu0 0
  %268 = vmatmul.mubr.bf16.gmra.mrb[0].mxu0 %v129
  %v269 = vpop.f32.mrb[0].mxu0
  %v270 = vadd.f32 0.0, %v269
  %v271 = vpop.f32.mrb[0].mxu0
  %v272 = vpop.f32.mrb[0].mxu0
  %v273 = vadd.f32 0.0, %v272
  %v274 = vpop.f32.mrb[0].mxu0
  %275 = vmatprep.mubr.bf16.mxu0 0
  %276 = vmatmul.mubr.bf16.gmra.mrb[0].mxu0 %v130
  %v277 = vpop.f32.mrb[0].mxu0
  %v278 = vadd.f32 0.0, %v277
  %v279 = vpop.f32.mrb[0].mxu0
  %v280 = vpop.f32.mrb[0].mxu0
  %v281 = vadd.f32 0.0, %v280
  %v282 = vpop.f32.mrb[0].mxu0
  %283 = vdwg.mxu0
  %v284 = vadd.f32 %v59, %v222
  %v285 = vadd.f32 %v60, %v225
  %v286 = vadd.f32 %v61, %v230
  %v287 = vadd.f32 %v62, %v233
  %v288 = vadd.f32 %v63, %v238
  %v289 = vadd.f32 %v64, %v241
  %v290 = vadd.f32 %v65, %v246
  %v291 = vadd.f32 %v66, %v249
  %v292 = vadd.f32 %v67, %v254
  %v293 = vadd.f32 %v68, %v257
  %v294 = vadd.f32 %v69, %v262
  %v295 = vadd.f32 %v70, %v265
  %v296 = vadd.f32 %v71, %v270
  %v297 = vadd.f32 %v72, %v273
  %v298 = vadd.f32 %v73, %v278
  %v299 = vadd.f32 %v74, %v281
  %300 = vst [vmem:[#allocation2] sm:$0xff] %v284
  %301 = vst [vmem:[#allocation2 + $0x8] sm:$0xff] %v285
  %302 = vst [vmem:[#allocation2 + $0x10] sm:$0xff] %v286
  %303 = vst [vmem:[#allocation2 + $0x18] sm:$0xff] %v287
  %304 = vst [vmem:[#allocation2 + $0x20] sm:$0xff] %v288
  %305 = vst [vmem:[#allocation2 + $0x28] sm:$0xff] %v289
  %306 = vst [vmem:[#allocation2 + $0x30] sm:$0xff] %v290
  %307 = vst [vmem:[#allocation2 + $0x38] sm:$0xff] %v291
  %308 = vst [vmem:[#allocation2 + $0x40] sm:$0xff] %v292
  %309 = vst [vmem:[#allocation2 + $0x48] sm:$0xff] %v293
  %310 = vst [vmem:[#allocation2 + $0x50] sm:$0xff] %v294
  %311 = vst [vmem:[#allocation2 + $0x58] sm:$0xff] %v295
  %312 = vst [vmem:[#allocation2 + $0x60] sm:$0xff] %v296
  %313 = vst [vmem:[#allocation2 + $0x68] sm:$0xff] %v297
  %314 = vst [vmem:[#allocation2 + $0x70] sm:$0xff] %v298
  %315 = vst [vmem:[#allocation2 + $0x78] sm:$0xff] %v299
  // Predicated region
  $region22: #{_gcnii_forward_impl.6} parent=0 // pred_check
    %p316 = pneg %p18
  $region23: #{_gcnii_forward_impl.6} parent=0 // pred_check_branch
    %318 = sbr.rel (%p316) target = $region25
  $region24: #{_gcnii_forward_impl.6} parent=0 // pred_region
    %v319 = vld [vmem:[#allocation2] sm:$0xff]
    %v320 = vld [vmem:[#allocation2 + $0x8] sm:$0xff]
    %v321 = vld [vmem:[#allocation2 + $0x10] sm:$0xff]
    %v322 = vld [vmem:[#allocation2 + $0x18] sm:$0xff]
    %v323 = vld [vmem:[#allocation2 + $0x20] sm:$0xff]
    %v324 = vld [vmem:[#allocation2 + $0x28] sm:$0xff]
    %v325 = vld [vmem:[#allocation2 + $0x30] sm:$0xff]
    %v326 = vld [vmem:[#allocation2 + $0x38] sm:$0xff]
    %v327 = vld [vmem:[#allocation2 + $0x40] sm:$0xff]
    %v328 = vld [vmem:[#allocation2 + $0x48] sm:$0xff]
    %v329 = vld [vmem:[#allocation2 + $0x50] sm:$0xff]
    %v330 = vld [vmem:[#allocation2 + $0x58] sm:$0xff]
    %v331 = vld [vmem:[#allocation2 + $0x60] sm:$0xff]
    %v332 = vld [vmem:[#allocation2 + $0x68] sm:$0xff]
    %v333 = vld [vmem:[#allocation2 + $0x70] sm:$0xff]
    %v334 = vld [vmem:[#allocation2 + $0x78] sm:$0xff]
    %v335 = vld [vmem:[%s2] sm:$0xff]
    %v336 = vld [vmem:[%s2 + $0x8] sm:$0xff]
    %v337 = vld [vmem:[%s2 + $0x10] sm:$0xff]
    %v338 = vld [vmem:[%s2 + $0x18] sm:$0xff]
    %v339 = vld [vmem:[%s2 + $0x20] sm:$0xff]
    %v340 = vld [vmem:[%s2 + $0x28] sm:$0xff]
    %v341 = vld [vmem:[%s2 + $0x30] sm:$0xff]
    %v342 = vld [vmem:[%s2 + $0x38] sm:$0xff]
    %v343 = vld [vmem:[%s2 + $0x40] sm:$0xff]
    %v344 = vld [vmem:[%s2 + $0x48] sm:$0xff]
    %v345 = vld [vmem:[%s2 + $0x50] sm:$0xff]
    %v346 = vld [vmem:[%s2 + $0x58] sm:$0xff]
    %v347 = vld [vmem:[%s2 + $0x60] sm:$0xff]
    %v348 = vld [vmem:[%s2 + $0x68] sm:$0xff]
    %v349 = vld [vmem:[%s2 + $0x70] sm:$0xff]
    %v350 = vld [vmem:[%s2 + $0x78] sm:$0xff]
    %v351 = vmul.f32 %v319, 0.9
    %v352 = vmul.f32 %v320, 0.9
    %v353 = vmul.f32 %v321, 0.9
    %v354 = vmul.f32 %v322, 0.9
    %v355 = vmul.f32 %v323, 0.9
    %v356 = vmul.f32 %v324, 0.9
    %v357 = vmul.f32 %v325, 0.9
    %v358 = vmul.f32 %v326, 0.9
    %v359 = vmul.f32 %v327, 0.9
    %v360 = vmul.f32 %v328, 0.9
    %v361 = vmul.f32 %v329, 0.9
    %v362 = vmul.f32 %v330, 0.9
    %v363 = vmul.f32 %v331, 0.9
    %v364 = vmul.f32 %v332, 0.9
    %v365 = vmul.f32 %v333, 0.9
    %v366 = vmul.f32 %v334, 0.9
    %v367 = vmul.f32 %v335, 0.1
    %v368 = vmul.f32 %v336, 0.1
    %v369 = vmul.f32 %v337, 0.1
    %v370 = vmul.f32 %v338, 0.1
    %v371 = vmul.f32 %v339, 0.1
    %v372 = vmul.f32 %v340, 0.1
    %v373 = vmul.f32 %v341, 0.1
    %v374 = vmul.f32 %v342, 0.1
    %v375 = vmul.f32 %v343, 0.1
    %v376 = vmul.f32 %v344, 0.1
    %v377 = vmul.f32 %v345, 0.1
    %v378 = vmul.f32 %v346, 0.1
    %v379 = vmul.f32 %v347, 0.1
    %v380 = vmul.f32 %v348, 0.1
    %v381 = vmul.f32 %v349, 0.1
    %v382 = vmul.f32 %v350, 0.1
    %v383 = vadd.f32 %v351, %v367
    %v384 = vadd.f32 %v352, %v368
    %v385 = vadd.f32 %v353, %v369
    %v386 = vadd.f32 %v354, %v370
    %v387 = vadd.f32 %v355, %v371
    %v388 = vadd.f32 %v356, %v372
    %v389 = vadd.f32 %v357, %v373
    %v390 = vadd.f32 %v358, %v374
    %v391 = vadd.f32 %v359, %v375
    %v392 = vadd.f32 %v360, %v376
    %v393 = vadd.f32 %v361, %v377
    %v394 = vadd.f32 %v362, %v378
    %v395 = vadd.f32 %v363, %v379
    %v396 = vadd.f32 %v364, %v380
    %v397 = vadd.f32 %v365, %v381
    %v398 = vadd.f32 %v366, %v382
    %v399 = vpack.c.bf16 %v384, %v383
    %v400 = vpack.c.bf16 %v386, %v385
    %v401 = vpack.c.bf16 %v388, %v387
    %v402 = vpack.c.bf16 %v390, %v389
    %v403 = vpack.c.bf16 %v392, %v391
    %v404 = vpack.c.bf16 %v394, %v393
    %v405 = vpack.c.bf16 %v396, %v395
    %v406 = vpack.c.bf16 %v398, %v397
    %v407 = vld [vmem:[%s3] sm:$0xf]
    %v408 = vld [vmem:[%s3 + $0x4] sm:$0xf]
    %v409 = vld [vmem:[%s3 + $0x8] sm:$0xf]
    %v410 = vld [vmem:[%s3 + $0xc] sm:$0xf]
    %v411 = vld [vmem:[%s3 + $0x10] sm:$0xf]
    %v412 = vld [vmem:[%s3 + $0x14] sm:$0xf]
    %v413 = vld [vmem:[%s3 + $0x18] sm:$0xf]
    %v414 = vld [vmem:[%s3 + $0x1c] sm:$0xf]
    %v415 = vld [vmem:[%s3 + $0x20] sm:$0xf]
    %v416 = vld [vmem:[%s3 + $0x24] sm:$0xf]
    %v417 = vld [vmem:[%s3 + $0x28] sm:$0xf]
    %v418 = vld [vmem:[%s3 + $0x2c] sm:$0xf]
    %v419 = vld [vmem:[%s3 + $0x30] sm:$0xf]
    %v420 = vld [vmem:[%s3 + $0x34] sm:$0xf]
    %v421 = vld [vmem:[%s3 + $0x38] sm:$0xf]
    %v422 = vld [vmem:[%s3 + $0x3c] sm:$0xf]
    %v423 = vmul.f32 %v383, 0.7768564
    %v424 = vmul.f32 %v384, 0.7768564
    %v425 = vmul.f32 %v385, 0.7768564
    %v426 = vmul.f32 %v386, 0.7768564
    %v427 = vmul.f32 %v387, 0.7768564
    %v428 = vmul.f32 %v388, 0.7768564
    %v429 = vmul.f32 %v389, 0.7768564
    %v430 = vmul.f32 %v390, 0.7768564
    %v431 = vmul.f32 %v391, 0.7768564
    %v432 = vmul.f32 %v392, 0.7768564
    %v433 = vmul.f32 %v393, 0.7768564
    %v434 = vmul.f32 %v394, 0.7768564
    %v435 = vmul.f32 %v395, 0.7768564
    %v436 = vmul.f32 %v396, 0.7768564
    %v437 = vmul.f32 %v397, 0.7768564
    %v438 = vmul.f32 %v398, 0.7768564
    %v455 = vunpack.c.l.b16 %v407
    %v456 = vunpack.c.l.b16 %v408
    %v457 = vunpack.c.l.b16 %v409
    %v458 = vunpack.c.l.b16 %v410
    %v459 = vunpack.c.l.b16 %v411
    %v460 = vunpack.c.l.b16 %v412
    %v461 = vunpack.c.l.b16 %v413
    %v462 = vunpack.c.l.b16 %v414
    %v463 = vunpack.c.l.b16 %v415
    %v464 = vunpack.c.l.b16 %v416
    %v465 = vunpack.c.l.b16 %v417
    %v466 = vunpack.c.l.b16 %v418
    %v467 = vunpack.c.l.b16 %v419
    %v468 = vunpack.c.l.b16 %v420
    %v469 = vunpack.c.l.b16 %v421
    %v470 = vunpack.c.l.b16 %v422
    %v471 = vpack.c.b16 %v456, %v455
    %v472 = vpack.c.b16 %v458, %v457
    %v473 = vpack.c.b16 %v460, %v459
    %v474 = vpack.c.b16 %v462, %v461
    %v475 = vpack.c.b16 %v464, %v463
    %v476 = vpack.c.b16 %v466, %v465
    %v477 = vpack.c.b16 %v468, %v467
    %v478 = vpack.c.b16 %v470, %v469
    %487 = vmatprep.subr.bf16.mxu0 0
    %488 = vmatpush1.bf16.msra.mxu0 %v471
    %489 = vmatprep.subr.bf16.mxu0 0
    %490 = vmatpush1.bf16.msra.mxu0 %v472
    %491 = vmatprep.subr.bf16.mxu0 0
    %492 = vmatpush1.bf16.msra.mxu0 %v473
    %493 = vmatprep.subr.bf16.mxu0 0
    %494 = vmatpush1.bf16.msra.mxu0 %v474
    %495 = vmatprep.subr.bf16.mxu0 0
    %496 = vmatpush1.bf16.msra.mxu0 %v475
    %497 = vmatprep.subr.bf16.mxu0 0
    %498 = vmatpush1.bf16.msra.mxu0 %v476
    %499 = vmatprep.subr.bf16.mxu0 0
    %500 = vmatpush1.bf16.msra.mxu0 %v477
    %501 = vmatprep.subr.bf16.mxu0 0
    %502 = vmatpush1.bf16.msra.mxu0 %v478
    %503 = vmatprep.subr.bf16.mxu0 0
    %504 = vmatpush1.bf16.msra.mxu0 0
    %505 = vmatprep.subr.bf16.mxu0 0
    %506 = vmatpush1.bf16.msra.mxu0 0
    %507 = vmatprep.subr.bf16.mxu0 0
    %508 = vmatpush1.bf16.msra.mxu0 0
    %509 = vmatprep.subr.bf16.mxu0 0
    %510 = vmatpush1.bf16.msra.mxu0 0
    %511 = vmatprep.subr.bf16.mxu0 0
    %512 = vmatpush1.bf16.msra.mxu0 0
    %513 = vmatprep.subr.bf16.mxu0 0
    %514 = vmatpush1.bf16.msra.mxu0 0
    %515 = vmatprep.subr.bf16.mxu0 0
    %516 = vmatpush1.bf16.msra.mxu0 0
    %517 = vmatprep.subr.bf16.mxu0 0
    %518 = vmatpush1.bf16.msra.mxu0 0
    %519 = vmatprep.mubr.bf16.mxu0 0
    %520 = vmatmul.mubr.bf16.gmra.mrb[0].mxu0 %v399
    %v521 = vpop.f32.mrb[0].mxu0
    %v522 = vadd.f32 %v423, %v521
    %v523 = vpop.f32.mrb[0].mxu0
    %v524 = vpop.f32.mrb[0].mxu0
    %v525 = vadd.f32 %v424, %v524
    %v526 = vpop.f32.mrb[0].mxu0
    %527 = vmatprep.mubr.bf16.mxu0 0
    %528 = vmatmul.mubr.bf16.gmra.mrb[0].mxu0 %v400
    %v529 = vpop.f32.mrb[0].mxu0
    %v530 = vadd.f32 %v425, %v529
    %v531 = vpop.f32.mrb[0].mxu0
    %v532 = vpop.f32.mrb[0].mxu0
    %v533 = vadd.f32 %v426, %v532
    %v534 = vpop.f32.mrb[0].mxu0
    %535 = vmatprep.mubr.bf16.mxu0 0
    %536 = vmatmul.mubr.bf16.gmra.mrb[0].mxu0 %v401
    %v537 = vpop.f32.mrb[0].mxu0
    %v538 = vadd.f32 %v427, %v537
    %v539 = vpop.f32.mrb[0].mxu0
    %v540 = vpop.f32.mrb[0].mxu0
    %v541 = vadd.f32 %v428, %v540
    %v542 = vpop.f32.mrb[0].mxu0
    %543 = vmatprep.mubr.bf16.mxu0 0
    %544 = vmatmul.mubr.bf16.gmra.mrb[0].mxu0 %v402
    %v545 = vpop.f32.mrb[0].mxu0
    %v546 = vadd.f32 %v429, %v545
    %v547 = vpop.f32.mrb[0].mxu0
    %v548 = vpop.f32.mrb[0].mxu0
    %v549 = vadd.f32 %v430, %v548
    %v550 = vpop.f32.mrb[0].mxu0
    %551 = vmatprep.mubr.bf16.mxu0 0
    %552 = vmatmul.mubr.bf16.gmra.mrb[0].mxu0 %v403
    %v553 = vpop.f32.mrb[0].mxu0
    %v554 = vadd.f32 %v431, %v553
    %v555 = vpop.f32.mrb[0].mxu0
    %v556 = vpop.f32.mrb[0].mxu0
    %v557 = vadd.f32 %v432, %v556
    %v558 = vpop.f32.mrb[0].mxu0
    %559 = vmatprep.mubr.bf16.mxu0 0
    %560 = vmatmul.mubr.bf16.gmra.mrb[0].mxu0 %v404
    %v561 = vpop.f32.mrb[0].mxu0
    %v562 = vadd.f32 %v433, %v561
    %v563 = vpop.f32.mrb[0].mxu0
    %v564 = vpop.f32.mrb[0].mxu0
    %v565 = vadd.f32 %v434, %v564
    %v566 = vpop.f32.mrb[0].mxu0
    %567 = vmatprep.mubr.bf16.mxu0 0
    %568 = vmatmul.mubr.bf16.gmra.mrb[0].mxu0 %v405
    %v569 = vpop.f32.mrb[0].mxu0
    %v570 = vadd.f32 %v435, %v569
    %v571 = vpop.f32.mrb[0].mxu0
    %v572 = vpop.f32.mrb[0].mxu0
    %v573 = vadd.f32 %v436, %v572
    %v574 = vpop.f32.mrb[0].mxu0
    %575 = vmatprep.mubr.bf16.mxu0 0
    %576 = vmatmul.mubr.bf16.gmra.mrb[0].mxu0 %v406
    %v577 = vpop.f32.mrb[0].mxu0
    %v578 = vadd.f32 %v437, %v577
    %v579 = vpop.f32.mrb[0].mxu0
    %v580 = vpop.f32.mrb[0].mxu0
    %v581 = vadd.f32 %v438, %v580
    %v582 = vpop.f32.mrb[0].mxu0
    %583 = vdwg.mxu0
    %v584 = vmax.f32 %v522, 0.0
    %v585 = vmax.f32 %v525, 0.0
    %v586 = vmax.f32 %v530, 0.0
    %v587 = vmax.f32 %v533, 0.0
    %v588 = vmax.f32 %v538, 0.0
    %v589 = vmax.f32 %v541, 0.0
    %v590 = vmax.f32 %v546, 0.0
    %v591 = vmax.f32 %v549, 0.0
    %v592 = vmax.f32 %v554, 0.0
    %v593 = vmax.f32 %v557, 0.0
    %v594 = vmax.f32 %v562, 0.0
    %v595 = vmax.f32 %v565, 0.0
    %v596 = vmax.f32 %v570, 0.0
    %v597 = vmax.f32 %v573, 0.0
    %v598 = vmax.f32 %v578, 0.0
    %v599 = vmax.f32 %v581, 0.0
    %600 = vst [vmem:[%s4] sm:$0xff] %v584
    %601 = vst [vmem:[%s4 + $0x8] sm:$0xff] %v585
    %602 = vst [vmem:[%s4 + $0x10] sm:$0xff] %v586
    %603 = vst [vmem:[%s4 + $0x18] sm:$0xff] %v587
    %604 = vst [vmem:[%s4 + $0x20] sm:$0xff] %v588
    %605 = vst [vmem:[%s4 + $0x28] sm:$0xff] %v589
    %606 = vst [vmem:[%s4 + $0x30] sm:$0xff] %v590
    %607 = vst [vmem:[%s4 + $0x38] sm:$0xff] %v591
    %608 = vst [vmem:[%s4 + $0x40] sm:$0xff] %v592
    %609 = vst [vmem:[%s4 + $0x48] sm:$0xff] %v593
    %610 = vst [vmem:[%s4 + $0x50] sm:$0xff] %v594
    %611 = vst [vmem:[%s4 + $0x58] sm:$0xff] %v595
    %612 = vst [vmem:[%s4 + $0x60] sm:$0xff] %v596
    %613 = vst [vmem:[%s4 + $0x68] sm:$0xff] %v597
    %614 = vst [vmem:[%s4 + $0x70] sm:$0xff] %v598
    %615 = vst [vmem:[%s4 + $0x78] sm:$0xff] %v599
  $region25: #{_gcnii_forward_impl.6} parent=0 // pred_fallthru
    _
  // Predicated region
  $region26: #{_gcnii_forward_impl.6} parent=0 // pred_check
    _
  $region27: #{_gcnii_forward_impl.6} parent=0 // pred_check_branch
    %617 = sbr.rel (0) target = $region29
  $region28: #{_gcnii_forward_impl.6} parent=0 // pred_region
    _
  $region29: #{_gcnii_forward_impl.6} parent=0 // pred_fallthru
    _
  // Predicated region
  $region30: #{_gcnii_forward_impl.6} parent=0 // pred_check
    _
  $region31: #{_gcnii_forward_impl.6} parent=0 // pred_check_branch
    %619 = sbr.rel (0) target = $region33
  $region32: #{_gcnii_forward_impl.6} parent=0 // pred_region
    _
  $region33: #{_gcnii_forward_impl.6} parent=0 // pred_fallthru
    _

// kernel: _gcnii_forward_impl.5
$region0: #{_gcnii_forward_impl.5}
  #allocation0 [shape = 'u32[]', space=smem, size = 0x4, offset = 0x4, fixed_abs, tag = 'smem constant byte address 0x4 - core index']
  #allocation1 [shape = 'u32[144,128]{1,0:T(1,128)}', space=vmem, size = 0x12000, scoped, tag = 'internal scratch']
  #allocation2 [shape = 'f32[128,128]{1,0:T(8,128)}', space=vmem, size = 0x10000, scoped, tag = 'scratch operand']
  %s0 = inlined_call_operand.vmem [shape: bf16[128,128], index: 0, kind: input, shape index: {}]
  %s1 = inlined_call_operand.vmem [shape: bf16[128,128], index: 1, kind: input, shape index: {}]
  %s2 = inlined_call_operand.vmem [shape: f32[128,128], index: 2, kind: input, shape index: {}]
  %s3 = inlined_call_operand.vmem [shape: bf16[128,128], index: 3, kind: input, shape index: {}]
  %s4 = inlined_call_operand.vmem [shape: bf16[128,128], index: 4, kind: output, shape index: {}]
  %s5 = sld [smem:[#allocation0]]
  $region34: #{_gcnii_forward_impl.5} parent=0
    _
  %s7 = ssub.s32 1, %s5
  %s8 = scalar_select 0, %s7, %s5
  // Predicated region
  $region2: #{_gcnii_forward_impl.5} parent=0 // pred_check
    _
  $region3: #{_gcnii_forward_impl.5} parent=0 // pred_check_branch
    %10 = sbr.rel (0) target = $region5
  $region4: #{_gcnii_forward_impl.5} parent=0 // pred_region
    _
  $region5: #{_gcnii_forward_impl.5} parent=0 // pred_fallthru
    _
  // Predicated region
  $region6: #{_gcnii_forward_impl.5} parent=0 // pred_check
    _
  $region7: #{_gcnii_forward_impl.5} parent=0 // pred_check_branch
    %12 = sbr.rel (0) target = $region9
  $region8: #{_gcnii_forward_impl.5} parent=0 // pred_region
    _
  $region9: #{_gcnii_forward_impl.5} parent=0 // pred_fallthru
    _
  // Predicated region
  $region10: #{_gcnii_forward_impl.5} parent=0 // pred_check
    _
  $region11: #{_gcnii_forward_impl.5} parent=0 // pred_check_branch
    %14 = sbr.rel (0) target = $region13
  $region12: #{_gcnii_forward_impl.5} parent=0 // pred_region
    _
  $region13: #{_gcnii_forward_impl.5} parent=0 // pred_fallthru
    _
  // Predicated region
  $region14: #{_gcnii_forward_impl.5} parent=0 // pred_check
    _
  $region15: #{_gcnii_forward_impl.5} parent=0 // pred_check_branch
    %16 = sbr.rel (0) target = $region17
  $region16: #{_gcnii_forward_impl.5} parent=0 // pred_region
    _
  $region17: #{_gcnii_forward_impl.5} parent=0 // pred_fallthru
    _
  %p18 = scmp.eq.s32.totalorder 0, 0
  // Predicated region
  $region18: #{_gcnii_forward_impl.5} parent=0 // pred_check
    %p19 = pneg %p18
  $region19: #{_gcnii_forward_impl.5} parent=0 // pred_check_branch
    %21 = sbr.rel (%p19) target = $region21
  $region20: #{_gcnii_forward_impl.5} parent=0 // pred_region
    %22 = vst [vmem:[#allocation2] sm:$0xff] 0.0
    %23 = vst [vmem:[#allocation2 + $0x8] sm:$0xff] 0.0
    %24 = vst [vmem:[#allocation2 + $0x10] sm:$0xff] 0.0
    %25 = vst [vmem:[#allocation2 + $0x18] sm:$0xff] 0.0
    %26 = vst [vmem:[#allocation2 + $0x20] sm:$0xff] 0.0
    %27 = vst [vmem:[#allocation2 + $0x28] sm:$0xff] 0.0
    %28 = vst [vmem:[#allocation2 + $0x30] sm:$0xff] 0.0
    %29 = vst [vmem:[#allocation2 + $0x38] sm:$0xff] 0.0
    %30 = vst [vmem:[#allocation2 + $0x40] sm:$0xff] 0.0
    %31 = vst [vmem:[#allocation2 + $0x48] sm:$0xff] 0.0
    %32 = vst [vmem:[#allocation2 + $0x50] sm:$0xff] 0.0
    %33 = vst [vmem:[#allocation2 + $0x58] sm:$0xff] 0.0
    %34 = vst [vmem:[#allocation2 + $0x60] sm:$0xff] 0.0
    %35 = vst [vmem:[#allocation2 + $0x68] sm:$0xff] 0.0
    %36 = vst [vmem:[#allocation2 + $0x70] sm:$0xff] 0.0
    %37 = vst [vmem:[#allocation2 + $0x78] sm:$0xff] 0.0
  $region21: #{_gcnii_forward_impl.5} parent=0 // pred_fallthru
    _
  %s38 = smul.u32 0, 128
  %s39 = sshra.s32 %s38, 3
  %s40 = sand.u32 %s38, 7
  %s41 = smul.addr %s39, 4
  %s42 = scalar_lea.vmem %s1, %s41
  %v43 = vld [vmem:[%s42] sm:$0xf]
  %v44 = vld [vmem:[%s42 + $0x4] sm:$0xf]
  %v45 = vld [vmem:[%s42 + $0x8] sm:$0xf]
  %v46 = vld [vmem:[%s42 + $0xc] sm:$0xf]
  %v47 = vld [vmem:[%s42 + $0x10] sm:$0xf]
  %v48 = vld [vmem:[%s42 + $0x14] sm:$0xf]
  %v49 = vld [vmem:[%s42 + $0x18] sm:$0xf]
  %v50 = vld [vmem:[%s42 + $0x1c] sm:$0xf]
  %v51 = vld [vmem:[%s42 + $0x20] sm:$0xf]
  %v52 = vld [vmem:[%s42 + $0x24] sm:$0xf]
  %v53 = vld [vmem:[%s42 + $0x28] sm:$0xf]
  %v54 = vld [vmem:[%s42 + $0x2c] sm:$0xf]
  %v55 = vld [vmem:[%s42 + $0x30] sm:$0xf]
  %v56 = vld [vmem:[%s42 + $0x34] sm:$0xf]
  %v57 = vld [vmem:[%s42 + $0x38] sm:$0xf]
  %v58 = vld [vmem:[%s42 + $0x3c] sm:$0xf]
  %v59 = vld [vmem:[#allocation2] sm:$0xff]
  %v60 = vld [vmem:[#allocation2 + $0x8] sm:$0xff]
  %v61 = vld [vmem:[#allocation2 + $0x10] sm:$0xff]
  %v62 = vld [vmem:[#allocation2 + $0x18] sm:$0xff]
  %v63 = vld [vmem:[#allocation2 + $0x20] sm:$0xff]
  %v64 = vld [vmem:[#allocation2 + $0x28] sm:$0xff]
  %v65 = vld [vmem:[#allocation2 + $0x30] sm:$0xff]
  %v66 = vld [vmem:[#allocation2 + $0x38] sm:$0xff]
  %v67 = vld [vmem:[#allocation2 + $0x40] sm:$0xff]
  %v68 = vld [vmem:[#allocation2 + $0x48] sm:$0xff]
  %v69 = vld [vmem:[#allocation2 + $0x50] sm:$0xff]
  %v70 = vld [vmem:[#allocation2 + $0x58] sm:$0xff]
  %v71 = vld [vmem:[#allocation2 + $0x60] sm:$0xff]
  %v72 = vld [vmem:[#allocation2 + $0x68] sm:$0xff]
  %v73 = vld [vmem:[#allocation2 + $0x70] sm:$0xff]
  %v74 = vld [vmem:[#allocation2 + $0x78] sm:$0xff]
  %v75 = vld [vmem:[%s0] sm:$0xf]
  %v76 = vld [vmem:[%s0 + $0x4] sm:$0xf]
  %v77 = vld [vmem:[%s0 + $0x8] sm:$0xf]
  %v78 = vld [vmem:[%s0 + $0xc] sm:$0xf]
  %v79 = vld [vmem:[%s0 + $0x10] sm:$0xf]
  %v80 = vld [vmem:[%s0 + $0x14] sm:$0xf]
  %v81 = vld [vmem:[%s0 + $0x18] sm:$0xf]
  %v82 = vld [vmem:[%s0 + $0x1c] sm:$0xf]
  %v83 = vld [vmem:[%s0 + $0x20] sm:$0xf]
  %v84 = vld [vmem:[%s0 + $0x24] sm:$0xf]
  %v85 = vld [vmem:[%s0 + $0x28] sm:$0xf]
  %v86 = vld [vmem:[%s0 + $0x2c] sm:$0xf]
  %v87 = vld [vmem:[%s0 + $0x30] sm:$0xf]
  %v88 = vld [vmem:[%s0 + $0x34] sm:$0xf]
  %v89 = vld [vmem:[%s0 + $0x38] sm:$0xf]
  %v90 = vld [vmem:[%s0 + $0x3c] sm:$0xf]
  %v107 = vunpack.c.l.b16 %v75
  %v108 = vunpack.c.l.b16 %v76
  %v109 = vunpack.c.l.b16 %v77
  %v110 = vunpack.c.l.b16 %v78
  %v111 = vunpack.c.l.b16 %v79
  %v112 = vunpack.c.l.b16 %v80
  %v113 = vunpack.c.l.b16 %v81
  %v114 = vunpack.c.l.b16 %v82
  %v115 = vunpack.c.l.b16 %v83
  %v116 = vunpack.c.l.b16 %v84
  %v117 = vunpack.c.l.b16 %v85
  %v118 = vunpack.c.l.b16 %v86
  %v119 = vunpack.c.l.b16 %v87
  %v120 = vunpack.c.l.b16 %v88
  %v121 = vunpack.c.l.b16 %v89
  %v122 = vunpack.c.l.b16 %v90
  %v123 = vpack.c.b16 %v108, %v107
  %v124 = vpack.c.b16 %v110, %v109
  %v125 = vpack.c.b16 %v112, %v111
  %v126 = vpack.c.b16 %v114, %v113
  %v127 = vpack.c.b16 %v116, %v115
  %v128 = vpack.c.b16 %v118, %v117
  %v129 = vpack.c.b16 %v120, %v119
  %v130 = vpack.c.b16 %v122, %v121
  %v155 = vunpack.c.l.b16 %v43
  %v156 = vunpack.c.l.b16 %v44
  %v157 = vunpack.c.l.b16 %v45
  %v158 = vunpack.c.l.b16 %v46
  %v159 = vunpack.c.l.b16 %v47
  %v160 = vunpack.c.l.b16 %v48
  %v161 = vunpack.c.l.b16 %v49
  %v162 = vunpack.c.l.b16 %v50
  %v163 = vunpack.c.l.b16 %v51
  %v164 = vunpack.c.l.b16 %v52
  %v165 = vunpack.c.l.b16 %v53
  %v166 = vunpack.c.l.b16 %v54
  %v167 = vunpack.c.l.b16 %v55
  %v168 = vunpack.c.l.b16 %v56
  %v169 = vunpack.c.l.b16 %v57
  %v170 = vunpack.c.l.b16 %v58
  %v171 = vpack.c.b16 %v156, %v155
  %v172 = vpack.c.b16 %v158, %v157
  %v173 = vpack.c.b16 %v160, %v159
  %v174 = vpack.c.b16 %v162, %v161
  %v175 = vpack.c.b16 %v164, %v163
  %v176 = vpack.c.b16 %v166, %v165
  %v177 = vpack.c.b16 %v168, %v167
  %v178 = vpack.c.b16 %v170, %v169
  %187 = vmatprep.subr.bf16.mxu0 0
  %188 = vmatpush1.bf16.msra.mxu0 %v171
  %189 = vmatprep.subr.bf16.mxu0 0
  %190 = vmatpush1.bf16.msra.mxu0 %v172
  %191 = vmatprep.subr.bf16.mxu0 0
  %192 = vmatpush1.bf16.msra.mxu0 %v173
  %193 = vmatprep.subr.bf16.mxu0 0
  %194 = vmatpush1.bf16.msra.mxu0 %v174
  %195 = vmatprep.subr.bf16.mxu0 0
  %196 = vmatpush1.bf16.msra.mxu0 %v175
  %197 = vmatprep.subr.bf16.mxu0 0
  %198 = vmatpush1.bf16.msra.mxu0 %v176
  %199 = vmatprep.subr.bf16.mxu0 0
  %200 = vmatpush1.bf16.msra.mxu0 %v177
  %201 = vmatprep.subr.bf16.mxu0 0
  %202 = vmatpush1.bf16.msra.mxu0 %v178
  %203 = vmatprep.subr.bf16.mxu0 0
  %204 = vmatpush1.bf16.msra.mxu0 0
  %205 = vmatprep.subr.bf16.mxu0 0
  %206 = vmatpush1.bf16.msra.mxu0 0
  %207 = vmatprep.subr.bf16.mxu0 0
  %208 = vmatpush1.bf16.msra.mxu0 0
  %209 = vmatprep.subr.bf16.mxu0 0
  %210 = vmatpush1.bf16.msra.mxu0 0
  %211 = vmatprep.subr.bf16.mxu0 0
  %212 = vmatpush1.bf16.msra.mxu0 0
  %213 = vmatprep.subr.bf16.mxu0 0
  %214 = vmatpush1.bf16.msra.mxu0 0
  %215 = vmatprep.subr.bf16.mxu0 0
  %216 = vmatpush1.bf16.msra.mxu0 0
  %217 = vmatprep.subr.bf16.mxu0 0
  %218 = vmatpush1.bf16.msra.mxu0 0
  %219 = vmatprep.mubr.bf16.mxu0 0
  %220 = vmatmul.mubr.bf16.gmra.mrb[0].mxu0 %v123
  %v221 = vpop.f32.mrb[0].mxu0
  %v222 = vadd.f32 0.0, %v221
  %v223 = vpop.f32.mrb[0].mxu0
  %v224 = vpop.f32.mrb[0].mxu0
  %v225 = vadd.f32 0.0, %v224
  %v226 = vpop.f32.mrb[0].mxu0
  %227 = vmatprep.mubr.bf16.mxu0 0
  %228 = vmatmul.mubr.bf16.gmra.mrb[0].mxu0 %v124
  %v229 = vpop.f32.mrb[0].mxu0
  %v230 = vadd.f32 0.0, %v229
  %v231 = vpop.f32.mrb[0].mxu0
  %v232 = vpop.f32.mrb[0].mxu0
  %v233 = vadd.f32 0.0, %v232
  %v234 = vpop.f32.mrb[0].mxu0
  %235 = vmatprep.mubr.bf16.mxu0 0
  %236 = vmatmul.mubr.bf16.gmra.mrb[0].mxu0 %v125
  %v237 = vpop.f32.mrb[0].mxu0
  %v238 = vadd.f32 0.0, %v237
  %v239 = vpop.f32.mrb[0].mxu0
  %v240 = vpop.f32.mrb[0].mxu0
  %v241 = vadd.f32 0.0, %v240
  %v242 = vpop.f32.mrb[0].mxu0
  %243 = vmatprep.mubr.bf16.mxu0 0
  %244 = vmatmul.mubr.bf16.gmra.mrb[0].mxu0 %v126
  %v245 = vpop.f32.mrb[0].mxu0
  %v246 = vadd.f32 0.0, %v245
  %v247 = vpop.f32.mrb[0].mxu0
  %v248 = vpop.f32.mrb[0].mxu0
  %v249 = vadd.f32 0.0, %v248
  %v250 = vpop.f32.mrb[0].mxu0
  %251 = vmatprep.mubr.bf16.mxu0 0
  %252 = vmatmul.mubr.bf16.gmra.mrb[0].mxu0 %v127
  %v253 = vpop.f32.mrb[0].mxu0
  %v254 = vadd.f32 0.0, %v253
  %v255 = vpop.f32.mrb[0].mxu0
  %v256 = vpop.f32.mrb[0].mxu0
  %v257 = vadd.f32 0.0, %v256
  %v258 = vpop.f32.mrb[0].mxu0
  %259 = vmatprep.mubr.bf16.mxu0 0
  %260 = vmatmul.mubr.bf16.gmra.mrb[0].mxu0 %v128
  %v261 = vpop.f32.mrb[0].mxu0
  %v262 = vadd.f32 0.0, %v261
  %v263 = vpop.f32.mrb[0].mxu0
  %v264 = vpop.f32.mrb[0].mxu0
  %v265 = vadd.f32 0.0, %v264
  %v266 = vpop.f32.mrb[0].mxu0
  %267 = vmatprep.mubr.bf16.mxu0 0
  %268 = vmatmul.mubr.bf16.gmra.mrb[0].mxu0 %v129
  %v269 = vpop.f32.mrb[0].mxu0
  %v270 = vadd.f32 0.0, %v269
  %v271 = vpop.f32.mrb[0].mxu0
  %v272 = vpop.f32.mrb[0].mxu0
  %v273 = vadd.f32 0.0, %v272
  %v274 = vpop.f32.mrb[0].mxu0
  %275 = vmatprep.mubr.bf16.mxu0 0
  %276 = vmatmul.mubr.bf16.gmra.mrb[0].mxu0 %v130
  %v277 = vpop.f32.mrb[0].mxu0
  %v278 = vadd.f32 0.0, %v277
  %v279 = vpop.f32.mrb[0].mxu0
  %v280 = vpop.f32.mrb[0].mxu0
  %v281 = vadd.f32 0.0, %v280
  %v282 = vpop.f32.mrb[0].mxu0
  %283 = vdwg.mxu0
  %v284 = vadd.f32 %v59, %v222
  %v285 = vadd.f32 %v60, %v225
  %v286 = vadd.f32 %v61, %v230
  %v287 = vadd.f32 %v62, %v233
  %v288 = vadd.f32 %v63, %v238
  %v289 = vadd.f32 %v64, %v241
  %v290 = vadd.f32 %v65, %v246
  %v291 = vadd.f32 %v66, %v249
  %v292 = vadd.f32 %v67, %v254
  %v293 = vadd.f32 %v68, %v257
  %v294 = vadd.f32 %v69, %v262
  %v295 = vadd.f32 %v70, %v265
  %v296 = vadd.f32 %v71, %v270
  %v297 = vadd.f32 %v72, %v273
  %v298 = vadd.f32 %v73, %v278
  %v299 = vadd.f32 %v74, %v281
  %300 = vst [vmem:[#allocation2] sm:$0xff] %v284
  %301 = vst [vmem:[#allocation2 + $0x8] sm:$0xff] %v285
  %302 = vst [vmem:[#allocation2 + $0x10] sm:$0xff] %v286
  %303 = vst [vmem:[#allocation2 + $0x18] sm:$0xff] %v287
  %304 = vst [vmem:[#allocation2 + $0x20] sm:$0xff] %v288
  %305 = vst [vmem:[#allocation2 + $0x28] sm:$0xff] %v289
  %306 = vst [vmem:[#allocation2 + $0x30] sm:$0xff] %v290
  %307 = vst [vmem:[#allocation2 + $0x38] sm:$0xff] %v291
  %308 = vst [vmem:[#allocation2 + $0x40] sm:$0xff] %v292
  %309 = vst [vmem:[#allocation2 + $0x48] sm:$0xff] %v293
  %310 = vst [vmem:[#allocation2 + $0x50] sm:$0xff] %v294
  %311 = vst [vmem:[#allocation2 + $0x58] sm:$0xff] %v295
  %312 = vst [vmem:[#allocation2 + $0x60] sm:$0xff] %v296
  %313 = vst [vmem:[#allocation2 + $0x68] sm:$0xff] %v297
  %314 = vst [vmem:[#allocation2 + $0x70] sm:$0xff] %v298
  %315 = vst [vmem:[#allocation2 + $0x78] sm:$0xff] %v299
  // Predicated region
  $region22: #{_gcnii_forward_impl.5} parent=0 // pred_check
    %p316 = pneg %p18
  $region23: #{_gcnii_forward_impl.5} parent=0 // pred_check_branch
    %318 = sbr.rel (%p316) target = $region25
  $region24: #{_gcnii_forward_impl.5} parent=0 // pred_region
    %v319 = vld [vmem:[#allocation2] sm:$0xff]
    %v320 = vld [vmem:[#allocation2 + $0x8] sm:$0xff]
    %v321 = vld [vmem:[#allocation2 + $0x10] sm:$0xff]
    %v322 = vld [vmem:[#allocation2 + $0x18] sm:$0xff]
    %v323 = vld [vmem:[#allocation2 + $0x20] sm:$0xff]
    %v324 = vld [vmem:[#allocation2 + $0x28] sm:$0xff]
    %v325 = vld [vmem:[#allocation2 + $0x30] sm:$0xff]
    %v326 = vld [vmem:[#allocation2 + $0x38] sm:$0xff]
    %v327 = vld [vmem:[#allocation2 + $0x40] sm:$0xff]
    %v328 = vld [vmem:[#allocation2 + $0x48] sm:$0xff]
    %v329 = vld [vmem:[#allocation2 + $0x50] sm:$0xff]
    %v330 = vld [vmem:[#allocation2 + $0x58] sm:$0xff]
    %v331 = vld [vmem:[#allocation2 + $0x60] sm:$0xff]
    %v332 = vld [vmem:[#allocation2 + $0x68] sm:$0xff]
    %v333 = vld [vmem:[#allocation2 + $0x70] sm:$0xff]
    %v334 = vld [vmem:[#allocation2 + $0x78] sm:$0xff]
    %v335 = vld [vmem:[%s2] sm:$0xff]
    %v336 = vld [vmem:[%s2 + $0x8] sm:$0xff]
    %v337 = vld [vmem:[%s2 + $0x10] sm:$0xff]
    %v338 = vld [vmem:[%s2 + $0x18] sm:$0xff]
    %v339 = vld [vmem:[%s2 + $0x20] sm:$0xff]
    %v340 = vld [vmem:[%s2 + $0x28] sm:$0xff]
    %v341 = vld [vmem:[%s2 + $0x30] sm:$0xff]
    %v342 = vld [vmem:[%s2 + $0x38] sm:$0xff]
    %v343 = vld [vmem:[%s2 + $0x40] sm:$0xff]
    %v344 = vld [vmem:[%s2 + $0x48] sm:$0xff]
    %v345 = vld [vmem:[%s2 + $0x50] sm:$0xff]
    %v346 = vld [vmem:[%s2 + $0x58] sm:$0xff]
    %v347 = vld [vmem:[%s2 + $0x60] sm:$0xff]
    %v348 = vld [vmem:[%s2 + $0x68] sm:$0xff]
    %v349 = vld [vmem:[%s2 + $0x70] sm:$0xff]
    %v350 = vld [vmem:[%s2 + $0x78] sm:$0xff]
    %v351 = vmul.f32 %v319, 0.9
    %v352 = vmul.f32 %v320, 0.9
    %v353 = vmul.f32 %v321, 0.9
    %v354 = vmul.f32 %v322, 0.9
    %v355 = vmul.f32 %v323, 0.9
    %v356 = vmul.f32 %v324, 0.9
    %v357 = vmul.f32 %v325, 0.9
    %v358 = vmul.f32 %v326, 0.9
    %v359 = vmul.f32 %v327, 0.9
    %v360 = vmul.f32 %v328, 0.9
    %v361 = vmul.f32 %v329, 0.9
    %v362 = vmul.f32 %v330, 0.9
    %v363 = vmul.f32 %v331, 0.9
    %v364 = vmul.f32 %v332, 0.9
    %v365 = vmul.f32 %v333, 0.9
    %v366 = vmul.f32 %v334, 0.9
    %v367 = vmul.f32 %v335, 0.1
    %v368 = vmul.f32 %v336, 0.1
    %v369 = vmul.f32 %v337, 0.1
    %v370 = vmul.f32 %v338, 0.1
    %v371 = vmul.f32 %v339, 0.1
    %v372 = vmul.f32 %v340, 0.1
    %v373 = vmul.f32 %v341, 0.1
    %v374 = vmul.f32 %v342, 0.1
    %v375 = vmul.f32 %v343, 0.1
    %v376 = vmul.f32 %v344, 0.1
    %v377 = vmul.f32 %v345, 0.1
    %v378 = vmul.f32 %v346, 0.1
    %v379 = vmul.f32 %v347, 0.1
    %v380 = vmul.f32 %v348, 0.1
    %v381 = vmul.f32 %v349, 0.1
    %v382 = vmul.f32 %v350, 0.1
    %v383 = vadd.f32 %v351, %v367
    %v384 = vadd.f32 %v352, %v368
    %v385 = vadd.f32 %v353, %v369
    %v386 = vadd.f32 %v354, %v370
    %v387 = vadd.f32 %v355, %v371
    %v388 = vadd.f32 %v356, %v372
    %v389 = vadd.f32 %v357, %v373
    %v390 = vadd.f32 %v358, %v374
    %v391 = vadd.f32 %v359, %v375
    %v392 = vadd.f32 %v360, %v376
    %v393 = vadd.f32 %v361, %v377
    %v394 = vadd.f32 %v362, %v378
    %v395 = vadd.f32 %v363, %v379
    %v396 = vadd.f32 %v364, %v380
    %v397 = vadd.f32 %v365, %v381
    %v398 = vadd.f32 %v366, %v382
    %v399 = vpack.c.bf16 %v384, %v383
    %v400 = vpack.c.bf16 %v386, %v385
    %v401 = vpack.c.bf16 %v388, %v387
    %v402 = vpack.c.bf16 %v390, %v389
    %v403 = vpack.c.bf16 %v392, %v391
    %v404 = vpack.c.bf16 %v394, %v393
    %v405 = vpack.c.bf16 %v396, %v395
    %v406 = vpack.c.bf16 %v398, %v397
    %v407 = vld [vmem:[%s3] sm:$0xf]
    %v408 = vld [vmem:[%s3 + $0x4] sm:$0xf]
    %v409 = vld [vmem:[%s3 + $0x8] sm:$0xf]
    %v410 = vld [vmem:[%s3 + $0xc] sm:$0xf]
    %v411 = vld [vmem:[%s3 + $0x10] sm:$0xf]
    %v412 = vld [vmem:[%s3 + $0x14] sm:$0xf]
    %v413 = vld [vmem:[%s3 + $0x18] sm:$0xf]
    %v414 = vld [vmem:[%s3 + $0x1c] sm:$0xf]
    %v415 = vld [vmem:[%s3 + $0x20] sm:$0xf]
    %v416 = vld [vmem:[%s3 + $0x24] sm:$0xf]
    %v417 = vld [vmem:[%s3 + $0x28] sm:$0xf]
    %v418 = vld [vmem:[%s3 + $0x2c] sm:$0xf]
    %v419 = vld [vmem:[%s3 + $0x30] sm:$0xf]
    %v420 = vld [vmem:[%s3 + $0x34] sm:$0xf]
    %v421 = vld [vmem:[%s3 + $0x38] sm:$0xf]
    %v422 = vld [vmem:[%s3 + $0x3c] sm:$0xf]
    %v423 = vmul.f32 %v383, 0.5945349
    %v424 = vmul.f32 %v384, 0.5945349
    %v425 = vmul.f32 %v385, 0.5945349
    %v426 = vmul.f32 %v386, 0.5945349
    %v427 = vmul.f32 %v387, 0.5945349
    %v428 = vmul.f32 %v388, 0.5945349
    %v429 = vmul.f32 %v389, 0.5945349
    %v430 = vmul.f32 %v390, 0.5945349
    %v431 = vmul.f32 %v391, 0.5945349
    %v432 = vmul.f32 %v392, 0.5945349
    %v433 = vmul.f32 %v393, 0.5945349
    %v434 = vmul.f32 %v394, 0.5945349
    %v435 = vmul.f32 %v395, 0.5945349
    %v436 = vmul.f32 %v396, 0.5945349
    %v437 = vmul.f32 %v397, 0.5945349
    %v438 = vmul.f32 %v398, 0.5945349
    %v455 = vunpack.c.l.b16 %v407
    %v456 = vunpack.c.l.b16 %v408
    %v457 = vunpack.c.l.b16 %v409
    %v458 = vunpack.c.l.b16 %v410
    %v459 = vunpack.c.l.b16 %v411
    %v460 = vunpack.c.l.b16 %v412
    %v461 = vunpack.c.l.b16 %v413
    %v462 = vunpack.c.l.b16 %v414
    %v463 = vunpack.c.l.b16 %v415
    %v464 = vunpack.c.l.b16 %v416
    %v465 = vunpack.c.l.b16 %v417
    %v466 = vunpack.c.l.b16 %v418
    %v467 = vunpack.c.l.b16 %v419
    %v468 = vunpack.c.l.b16 %v420
    %v469 = vunpack.c.l.b16 %v421
    %v470 = vunpack.c.l.b16 %v422
    %v471 = vpack.c.b16 %v456, %v455
    %v472 = vpack.c.b16 %v458, %v457
    %v473 = vpack.c.b16 %v460, %v459
    %v474 = vpack.c.b16 %v462, %v461
    %v475 = vpack.c.b16 %v464, %v463
    %v476 = vpack.c.b16 %v466, %v465
    %v477 = vpack.c.b16 %v468, %v467
    %v478 = vpack.c.b16 %v470, %v469
    %487 = vmatprep.subr.bf16.mxu0 0
    %488 = vmatpush1.bf16.msra.mxu0 %v471
    %489 = vmatprep.subr.bf16.mxu0 0
    %490 = vmatpush1.bf16.msra.mxu0 %v472
    %491 = vmatprep.subr.bf16.mxu0 0
    %492 = vmatpush1.bf16.msra.mxu0 %v473
    %493 = vmatprep.subr.bf16.mxu0 0
    %494 = vmatpush1.bf16.msra.mxu0 %v474
    %495 = vmatprep.subr.bf16.mxu0 0
    %496 = vmatpush1.bf16.msra.mxu0 %v475
    %497 = vmatprep.subr.bf16.mxu0 0
    %498 = vmatpush1.bf16.msra.mxu0 %v476
    %499 = vmatprep.subr.bf16.mxu0 0
    %500 = vmatpush1.bf16.msra.mxu0 %v477
    %501 = vmatprep.subr.bf16.mxu0 0
    %502 = vmatpush1.bf16.msra.mxu0 %v478
    %503 = vmatprep.subr.bf16.mxu0 0
    %504 = vmatpush1.bf16.msra.mxu0 0
    %505 = vmatprep.subr.bf16.mxu0 0
    %506 = vmatpush1.bf16.msra.mxu0 0
    %507 = vmatprep.subr.bf16.mxu0 0
    %508 = vmatpush1.bf16.msra.mxu0 0
    %509 = vmatprep.subr.bf16.mxu0 0
    %510 = vmatpush1.bf16.msra.mxu0 0
    %511 = vmatprep.subr.bf16.mxu0 0
    %512 = vmatpush1.bf16.msra.mxu0 0
    %513 = vmatprep.subr.bf16.mxu0 0
    %514 = vmatpush1.bf16.msra.mxu0 0
    %515 = vmatprep.subr.bf16.mxu0 0
    %516 = vmatpush1.bf16.msra.mxu0 0
    %517 = vmatprep.subr.bf16.mxu0 0
    %518 = vmatpush1.bf16.msra.mxu0 0
    %519 = vmatprep.mubr.bf16.mxu0 0
    %520 = vmatmul.mubr.bf16.gmra.mrb[0].mxu0 %v399
    %v521 = vpop.f32.mrb[0].mxu0
    %v522 = vadd.f32 %v423, %v521
    %v523 = vpop.f32.mrb[0].mxu0
    %v524 = vpop.f32.mrb[0].mxu0
    %v525 = vadd.f32 %v424, %v524
    %v526 = vpop.f32.mrb[0].mxu0
    %527 = vmatprep.mubr.bf16.mxu0 0
    %528 = vmatmul.mubr.bf16.gmra.mrb[0].mxu0 %v400
    %v529 = vpop.f32.mrb[0].mxu0
    %v530 = vadd.f32 %v425, %v529
    %v531 = vpop.f32.mrb[0].mxu0
    %v532 = vpop.f32.mrb[0].mxu0
    %v533 = vadd.f32 %v426, %v532
    %v534 = vpop.f32.mrb[0].mxu0
    %535 = vmatprep.mubr.bf16.mxu0 0
    %536 = vmatmul.mubr.bf16.gmra.mrb[0].mxu0 %v401
    %v537 = vpop.f32.mrb[0].mxu0
    %v538 = vadd.f32 %v427, %v537
    %v539 = vpop.f32.mrb[0].mxu0
    %v540 = vpop.f32.mrb[0].mxu0
    %v541 = vadd.f32 %v428, %v540
    %v542 = vpop.f32.mrb[0].mxu0
    %543 = vmatprep.mubr.bf16.mxu0 0
    %544 = vmatmul.mubr.bf16.gmra.mrb[0].mxu0 %v402
    %v545 = vpop.f32.mrb[0].mxu0
    %v546 = vadd.f32 %v429, %v545
    %v547 = vpop.f32.mrb[0].mxu0
    %v548 = vpop.f32.mrb[0].mxu0
    %v549 = vadd.f32 %v430, %v548
    %v550 = vpop.f32.mrb[0].mxu0
    %551 = vmatprep.mubr.bf16.mxu0 0
    %552 = vmatmul.mubr.bf16.gmra.mrb[0].mxu0 %v403
    %v553 = vpop.f32.mrb[0].mxu0
    %v554 = vadd.f32 %v431, %v553
    %v555 = vpop.f32.mrb[0].mxu0
    %v556 = vpop.f32.mrb[0].mxu0
    %v557 = vadd.f32 %v432, %v556
    %v558 = vpop.f32.mrb[0].mxu0
    %559 = vmatprep.mubr.bf16.mxu0 0
    %560 = vmatmul.mubr.bf16.gmra.mrb[0].mxu0 %v404
    %v561 = vpop.f32.mrb[0].mxu0
    %v562 = vadd.f32 %v433, %v561
    %v563 = vpop.f32.mrb[0].mxu0
    %v564 = vpop.f32.mrb[0].mxu0
    %v565 = vadd.f32 %v434, %v564
    %v566 = vpop.f32.mrb[0].mxu0
    %567 = vmatprep.mubr.bf16.mxu0 0
    %568 = vmatmul.mubr.bf16.gmra.mrb[0].mxu0 %v405
    %v569 = vpop.f32.mrb[0].mxu0
    %v570 = vadd.f32 %v435, %v569
    %v571 = vpop.f32.mrb[0].mxu0
    %v572 = vpop.f32.mrb[0].mxu0
    %v573 = vadd.f32 %v436, %v572
    %v574 = vpop.f32.mrb[0].mxu0
    %575 = vmatprep.mubr.bf16.mxu0 0
    %576 = vmatmul.mubr.bf16.gmra.mrb[0].mxu0 %v406
    %v577 = vpop.f32.mrb[0].mxu0
    %v578 = vadd.f32 %v437, %v577
    %v579 = vpop.f32.mrb[0].mxu0
    %v580 = vpop.f32.mrb[0].mxu0
    %v581 = vadd.f32 %v438, %v580
    %v582 = vpop.f32.mrb[0].mxu0
    %583 = vdwg.mxu0
    %v584 = vmax.f32 %v522, 0.0
    %v585 = vmax.f32 %v525, 0.0
    %v586 = vmax.f32 %v530, 0.0
    %v587 = vmax.f32 %v533, 0.0
    %v588 = vmax.f32 %v538, 0.0
    %v589 = vmax.f32 %v541, 0.0
    %v590 = vmax.f32 %v546, 0.0
    %v591 = vmax.f32 %v549, 0.0
    %v592 = vmax.f32 %v554, 0.0
    %v593 = vmax.f32 %v557, 0.0
    %v594 = vmax.f32 %v562, 0.0
    %v595 = vmax.f32 %v565, 0.0
    %v596 = vmax.f32 %v570, 0.0
    %v597 = vmax.f32 %v573, 0.0
    %v598 = vmax.f32 %v578, 0.0
    %v599 = vmax.f32 %v581, 0.0
    %v600 = vpack.c.bf16 %v585, %v584
    %v601 = vpack.c.bf16 %v587, %v586
    %v602 = vpack.c.bf16 %v589, %v588
    %v603 = vpack.c.bf16 %v591, %v590
    %v604 = vpack.c.bf16 %v593, %v592
    %v605 = vpack.c.bf16 %v595, %v594
    %v606 = vpack.c.bf16 %v597, %v596
    %v607 = vpack.c.bf16 %v599, %v598
    %v616 = vunpack.c.l.b16 %v600
    %v617 = vunpack.c.h.b16 %v600
    %v618 = vunpack.c.l.b16 %v601
    %v619 = vunpack.c.h.b16 %v601
    %v620 = vunpack.c.l.b16 %v602
    %v621 = vunpack.c.h.b16 %v602
    %v622 = vunpack.c.l.b16 %v603
    %v623 = vunpack.c.h.b16 %v603
    %v624 = vunpack.c.l.b16 %v604
    %v625 = vunpack.c.h.b16 %v604
    %v626 = vunpack.c.l.b16 %v605
    %v627 = vunpack.c.h.b16 %v605
    %v628 = vunpack.c.l.b16 %v606
    %v629 = vunpack.c.h.b16 %v606
    %v630 = vunpack.c.l.b16 %v607
    %v631 = vunpack.c.h.b16 %v607
    %v632 = vpack.c.b16 %v616, %v616
    %v633 = vpack.c.b16 %v617, %v617
    %v634 = vpack.c.b16 %v618, %v618
    %v635 = vpack.c.b16 %v619, %v619
    %v636 = vpack.c.b16 %v620, %v620
    %v637 = vpack.c.b16 %v621, %v621
    %v638 = vpack.c.b16 %v622, %v622
    %v639 = vpack.c.b16 %v623, %v623
    %v640 = vpack.c.b16 %v624, %v624
    %v641 = vpack.c.b16 %v625, %v625
    %v642 = vpack.c.b16 %v626, %v626
    %v643 = vpack.c.b16 %v627, %v627
    %v644 = vpack.c.b16 %v628, %v628
    %v645 = vpack.c.b16 %v629, %v629
    %v646 = vpack.c.b16 %v630, %v630
    %v647 = vpack.c.b16 %v631, %v631
    %664 = vst [vmem:[%s4] sm:$0xf] %v632
    %665 = vst [vmem:[%s4 + $0x4] sm:$0xf] %v633
    %666 = vst [vmem:[%s4 + $0x8] sm:$0xf] %v634
    %667 = vst [vmem:[%s4 + $0xc] sm:$0xf] %v635
    %668 = vst [vmem:[%s4 + $0x10] sm:$0xf] %v636
    %669 = vst [vmem:[%s4 + $0x14] sm:$0xf] %v637
    %670 = vst [vmem:[%s4 + $0x18] sm:$0xf] %v638
    %671 = vst [vmem:[%s4 + $0x1c] sm:$0xf] %v639
    %672 = vst [vmem:[%s4 + $0x20] sm:$0xf] %v640
    %673 = vst [vmem:[%s4 + $0x24] sm:$0xf] %v641
    %674 = vst [vmem:[%s4 + $0x28] sm:$0xf] %v642
    %675 = vst [vmem:[%s4 + $0x2c] sm:$0xf] %v643
    %676 = vst [vmem:[%s4 + $0x30] sm:$0xf] %v644
    %677 = vst [vmem:[%s4 + $0x34] sm:$0xf] %v645
    %678 = vst [vmem:[%s4 + $0x38] sm:$0xf] %v646
    %679 = vst [vmem:[%s4 + $0x3c] sm:$0xf] %v647
  $region25: #{_gcnii_forward_impl.5} parent=0 // pred_fallthru
    _
  // Predicated region
  $region26: #{_gcnii_forward_impl.5} parent=0 // pred_check
    _
  $region27: #{_gcnii_forward_impl.5} parent=0 // pred_check_branch
    %681 = sbr.rel (0) target = $region29
  $region28: #{_gcnii_forward_impl.5} parent=0 // pred_region
    _
  $region29: #{_gcnii_forward_impl.5} parent=0 // pred_fallthru
    _
  // Predicated region
  $region30: #{_gcnii_forward_impl.5} parent=0 // pred_check
    _
  $region31: #{_gcnii_forward_impl.5} parent=0 // pred_check_branch
    %683 = sbr.rel (0) target = $region33
  $region32: #{_gcnii_forward_impl.5} parent=0 // pred_region
    _
  $region33: #{_gcnii_forward_impl.5} parent=0 // pred_fallthru
    _

// kernel: _gcnii_forward_impl.7
$region0: #{_gcnii_forward_impl.7}
  #allocation0 [shape = 'u32[]', space=smem, size = 0x4, offset = 0x4, fixed_abs, tag = 'smem constant byte address 0x4 - core index']
  #allocation1 [shape = 'u32[144,128]{1,0:T(1,128)}', space=vmem, size = 0x12000, scoped, tag = 'internal scratch']
  %s0 = inlined_call_operand.vmem [shape: f32[128,128], index: 0, kind: input, shape index: {}]
  %s1 = inlined_call_operand.vmem [shape: f32[128,128], index: 1, kind: input, shape index: {}]
  %s2 = inlined_call_operand.vmem [shape: f32[1,128], index: 2, kind: input, shape index: {}]
  %s3 = inlined_call_operand.vmem [shape: f32[128,128], index: 3, kind: output, shape index: {}]
  %s4 = sld [smem:[#allocation0]]
  $region22: #{_gcnii_forward_impl.7} parent=0
    _
  %s6 = ssub.s32 1, %s4
  %s7 = scalar_select 0, %s6, %s4
  // Predicated region
  $region2: #{_gcnii_forward_impl.7} parent=0 // pred_check
    _
  $region3: #{_gcnii_forward_impl.7} parent=0 // pred_check_branch
    %9 = sbr.rel (0) target = $region5
  $region4: #{_gcnii_forward_impl.7} parent=0 // pred_region
    _
  $region5: #{_gcnii_forward_impl.7} parent=0 // pred_fallthru
    _
  // Predicated region
  $region6: #{_gcnii_forward_impl.7} parent=0 // pred_check
    _
  $region7: #{_gcnii_forward_impl.7} parent=0 // pred_check_branch
    %11 = sbr.rel (0) target = $region9
  $region8: #{_gcnii_forward_impl.7} parent=0 // pred_region
    _
  $region9: #{_gcnii_forward_impl.7} parent=0 // pred_fallthru
    _
  // Predicated region
  $region10: #{_gcnii_forward_impl.7} parent=0 // pred_check
    _
  $region11: #{_gcnii_forward_impl.7} parent=0 // pred_check_branch
    %13 = sbr.rel (0) target = $region13
  $region12: #{_gcnii_forward_impl.7} parent=0 // pred_region
    _
  $region13: #{_gcnii_forward_impl.7} parent=0 // pred_fallthru
    _
  %v14 = vld [vmem:[%s0] sm:$0xff]
  %v15 = vld [vmem:[%s0 + $0x8] sm:$0xff]
  %v16 = vld [vmem:[%s0 + $0x10] sm:$0xff]
  %v17 = vld [vmem:[%s0 + $0x18] sm:$0xff]
  %v18 = vld [vmem:[%s0 + $0x20] sm:$0xff]
  %v19 = vld [vmem:[%s0 + $0x28] sm:$0xff]
  %v20 = vld [vmem:[%s0 + $0x30] sm:$0xff]
  %v21 = vld [vmem:[%s0 + $0x38] sm:$0xff]
  %v22 = vld [vmem:[%s0 + $0x40] sm:$0xff]
  %v23 = vld [vmem:[%s0 + $0x48] sm:$0xff]
  %v24 = vld [vmem:[%s0 + $0x50] sm:$0xff]
  %v25 = vld [vmem:[%s0 + $0x58] sm:$0xff]
  %v26 = vld [vmem:[%s0 + $0x60] sm:$0xff]
  %v27 = vld [vmem:[%s0 + $0x68] sm:$0xff]
  %v28 = vld [vmem:[%s0 + $0x70] sm:$0xff]
  %v29 = vld [vmem:[%s0 + $0x78] sm:$0xff]
  %v30 = vld [vmem:[%s1] sm:$0xff]
  %v31 = vld [vmem:[%s1 + $0x8] sm:$0xff]
  %v32 = vld [vmem:[%s1 + $0x10] sm:$0xff]
  %v33 = vld [vmem:[%s1 + $0x18] sm:$0xff]
  %v34 = vld [vmem:[%s1 + $0x20] sm:$0xff]
  %v35 = vld [vmem:[%s1 + $0x28] sm:$0xff]
  %v36 = vld [vmem:[%s1 + $0x30] sm:$0xff]
  %v37 = vld [vmem:[%s1 + $0x38] sm:$0xff]
  %v38 = vld [vmem:[%s1 + $0x40] sm:$0xff]
  %v39 = vld [vmem:[%s1 + $0x48] sm:$0xff]
  %v40 = vld [vmem:[%s1 + $0x50] sm:$0xff]
  %v41 = vld [vmem:[%s1 + $0x58] sm:$0xff]
  %v42 = vld [vmem:[%s1 + $0x60] sm:$0xff]
  %v43 = vld [vmem:[%s1 + $0x68] sm:$0xff]
  %v44 = vld [vmem:[%s1 + $0x70] sm:$0xff]
  %v45 = vld [vmem:[%s1 + $0x78] sm:$0xff]
  %v46 = vld [vmem:[%s2] sm:$0x1]
  %v48 = vlaneseq
  %v49 = vshrl.u32 %v48, 7
  %v50 = vsub.s32 0, %v49
  %v51 = vrot.slane %v46, %v50
  %53 = vmatprep.subr.mxu0 0.0
  %54 = vmatpush1.msra.mxu0 %v30
  %55 = vmatprep.subr.mxu0 0.0
  %56 = vmatpush1.msra.mxu0 %v31
  %57 = vmatprep.subr.mxu0 0.0
  %58 = vmatpush1.msra.mxu0 %v32
  %59 = vmatprep.subr.mxu0 0.0
  %60 = vmatpush1.msra.mxu0 %v33
  %61 = vmatprep.subr.mxu0 0.0
  %62 = vmatpush1.msra.mxu0 %v34
  %63 = vmatprep.subr.mxu0 0.0
  %64 = vmatpush1.msra.mxu0 %v35
  %65 = vmatprep.subr.mxu0 0.0
  %66 = vmatpush1.msra.mxu0 %v36
  %67 = vmatprep.subr.mxu0 0.0
  %68 = vmatpush1.msra.mxu0 %v37
  %69 = vmatprep.subr.mxu0 0.0
  %70 = vmatpush1.msra.mxu0 %v38
  %71 = vmatprep.subr.mxu0 0.0
  %72 = vmatpush1.msra.mxu0 %v39
  %73 = vmatprep.subr.mxu0 0.0
  %74 = vmatpush1.msra.mxu0 %v40
  %75 = vmatprep.subr.mxu0 0.0
  %76 = vmatpush1.msra.mxu0 %v41
  %77 = vmatprep.subr.mxu0 0.0
  %78 = vmatpush1.msra.mxu0 %v42
  %79 = vmatprep.subr.mxu0 0.0
  %80 = vmatpush1.msra.mxu0 %v43
  %81 = vmatprep.subr.mxu0 0.0
  %82 = vmatpush1.msra.mxu0 %v44
  %83 = vmatprep.subr.mxu0 0.0
  %84 = vmatpush1.msra.mxu0 %v45
  %85 = vmatprep.subr.mxu0 0.0
  %86 = vmatpush1.msra.mxu0 0.0
  %87 = vmatprep.subr.mxu0 0.0
  %88 = vmatpush1.msra.mxu0 0.0
  %89 = vmatprep.subr.mxu0 0.0
  %90 = vmatpush1.msra.mxu0 0.0
  %91 = vmatprep.subr.mxu0 0.0
  %92 = vmatpush1.msra.mxu0 0.0
  %93 = vmatprep.subr.mxu0 0.0
  %94 = vmatpush1.msra.mxu0 0.0
  %95 = vmatprep.subr.mxu0 0.0
  %96 = vmatpush1.msra.mxu0 0.0
  %97 = vmatprep.subr.mxu0 0.0
  %98 = vmatpush1.msra.mxu0 0.0
  %99 = vmatprep.subr.mxu0 0.0
  %100 = vmatpush1.msra.mxu0 0.0
  %101 = vmatprep.subr.mxu0 0.0
  %102 = vmatpush1.msra.mxu0 0.0
  %103 = vmatprep.subr.mxu0 0.0
  %104 = vmatpush1.msra.mxu0 0.0
  %105 = vmatprep.subr.mxu0 0.0
  %106 = vmatpush1.msra.mxu0 0.0
  %107 = vmatprep.subr.mxu0 0.0
  %108 = vmatpush1.msra.mxu0 0.0
  %109 = vmatprep.subr.mxu0 0.0
  %110 = vmatpush1.msra.mxu0 0.0
  %111 = vmatprep.subr.mxu0 0.0
  %112 = vmatpush1.msra.mxu0 0.0
  %113 = vmatprep.subr.mxu0 0.0
  %114 = vmatpush1.msra.mxu0 0.0
  %115 = vmatprep.subr.mxu0 0.0
  %116 = vmatpush1.msra.mxu0 0.0
  %117 = vmatprep.mubr.f32.mxu0 0.0
  %118 = vmatmul.mubr.f32.gmra.mrb[0].mxu0 %v14
  %v119 = vpop.f32.mrb[0].mxu0
  %v120 = vadd.f32 %v51, %v119
  %v121 = vpop.f32.mrb[0].mxu0
  %122 = vmatprep.mubr.f32.mxu0 0.0
  %123 = vmatmul.mubr.f32.gmra.mrb[0].mxu0 %v15
  %v124 = vpop.f32.mrb[0].mxu0
  %v125 = vadd.f32 %v51, %v124
  %v126 = vpop.f32.mrb[0].mxu0
  %127 = vmatprep.mubr.f32.mxu0 0.0
  %128 = vmatmul.mubr.f32.gmra.mrb[0].mxu0 %v16
  %v129 = vpop.f32.mrb[0].mxu0
  %v130 = vadd.f32 %v51, %v129
  %v131 = vpop.f32.mrb[0].mxu0
  %132 = vmatprep.mubr.f32.mxu0 0.0
  %133 = vmatmul.mubr.f32.gmra.mrb[0].mxu0 %v17
  %v134 = vpop.f32.mrb[0].mxu0
  %v135 = vadd.f32 %v51, %v134
  %v136 = vpop.f32.mrb[0].mxu0
  %137 = vmatprep.mubr.f32.mxu0 0.0
  %138 = vmatmul.mubr.f32.gmra.mrb[0].mxu0 %v18
  %v139 = vpop.f32.mrb[0].mxu0
  %v140 = vadd.f32 %v51, %v139
  %v141 = vpop.f32.mrb[0].mxu0
  %142 = vmatprep.mubr.f32.mxu0 0.0
  %143 = vmatmul.mubr.f32.gmra.mrb[0].mxu0 %v19
  %v144 = vpop.f32.mrb[0].mxu0
  %v145 = vadd.f32 %v51, %v144
  %v146 = vpop.f32.mrb[0].mxu0
  %147 = vmatprep.mubr.f32.mxu0 0.0
  %148 = vmatmul.mubr.f32.gmra.mrb[0].mxu0 %v20
  %v149 = vpop.f32.mrb[0].mxu0
  %v150 = vadd.f32 %v51, %v149
  %v151 = vpop.f32.mrb[0].mxu0
  %152 = vmatprep.mubr.f32.mxu0 0.0
  %153 = vmatmul.mubr.f32.gmra.mrb[0].mxu0 %v21
  %v154 = vpop.f32.mrb[0].mxu0
  %v155 = vadd.f32 %v51, %v154
  %v156 = vpop.f32.mrb[0].mxu0
  %157 = vmatprep.mubr.f32.mxu0 0.0
  %158 = vmatmul.mubr.f32.gmra.mrb[0].mxu0 %v22
  %v159 = vpop.f32.mrb[0].mxu0
  %v160 = vadd.f32 %v51, %v159
  %v161 = vpop.f32.mrb[0].mxu0
  %162 = vmatprep.mubr.f32.mxu0 0.0
  %163 = vmatmul.mubr.f32.gmra.mrb[0].mxu0 %v23
  %v164 = vpop.f32.mrb[0].mxu0
  %v165 = vadd.f32 %v51, %v164
  %v166 = vpop.f32.mrb[0].mxu0
  %167 = vmatprep.mubr.f32.mxu0 0.0
  %168 = vmatmul.mubr.f32.gmra.mrb[0].mxu0 %v24
  %v169 = vpop.f32.mrb[0].mxu0
  %v170 = vadd.f32 %v51, %v169
  %v171 = vpop.f32.mrb[0].mxu0
  %172 = vmatprep.mubr.f32.mxu0 0.0
  %173 = vmatmul.mubr.f32.gmra.mrb[0].mxu0 %v25
  %v174 = vpop.f32.mrb[0].mxu0
  %v175 = vadd.f32 %v51, %v174
  %v176 = vpop.f32.mrb[0].mxu0
  %177 = vmatprep.mubr.f32.mxu0 0.0
  %178 = vmatmul.mubr.f32.gmra.mrb[0].mxu0 %v26
  %v179 = vpop.f32.mrb[0].mxu0
  %v180 = vadd.f32 %v51, %v179
  %v181 = vpop.f32.mrb[0].mxu0
  %182 = vmatprep.mubr.f32.mxu0 0.0
  %183 = vmatmul.mubr.f32.gmra.mrb[0].mxu0 %v27
  %v184 = vpop.f32.mrb[0].mxu0
  %v185 = vadd.f32 %v51, %v184
  %v186 = vpop.f32.mrb[0].mxu0
  %187 = vmatprep.mubr.f32.mxu0 0.0
  %188 = vmatmul.mubr.f32.gmra.mrb[0].mxu0 %v28
  %v189 = vpop.f32.mrb[0].mxu0
  %v190 = vadd.f32 %v51, %v189
  %v191 = vpop.f32.mrb[0].mxu0
  %192 = vmatprep.mubr.f32.mxu0 0.0
  %193 = vmatmul.mubr.f32.gmra.mrb[0].mxu0 %v29
  %v194 = vpop.f32.mrb[0].mxu0
  %v195 = vadd.f32 %v51, %v194
  %v196 = vpop.f32.mrb[0].mxu0
  %197 = vdwg.mxu0
  %198 = vst [vmem:[%s3] sm:$0xff] %v120
  %199 = vst [vmem:[%s3 + $0x8] sm:$0xff] %v125
  %200 = vst [vmem:[%s3 + $0x10] sm:$0xff] %v130
  %201 = vst [vmem:[%s3 + $0x18] sm:$0xff] %v135
  %202 = vst [vmem:[%s3 + $0x20] sm:$0xff] %v140
  %203 = vst [vmem:[%s3 + $0x28] sm:$0xff] %v145
  %204 = vst [vmem:[%s3 + $0x30] sm:$0xff] %v150
  %205 = vst [vmem:[%s3 + $0x38] sm:$0xff] %v155
  %206 = vst [vmem:[%s3 + $0x40] sm:$0xff] %v160
  %207 = vst [vmem:[%s3 + $0x48] sm:$0xff] %v165
  %208 = vst [vmem:[%s3 + $0x50] sm:$0xff] %v170
  %209 = vst [vmem:[%s3 + $0x58] sm:$0xff] %v175
  %210 = vst [vmem:[%s3 + $0x60] sm:$0xff] %v180
  %211 = vst [vmem:[%s3 + $0x68] sm:$0xff] %v185
  %212 = vst [vmem:[%s3 + $0x70] sm:$0xff] %v190
  %213 = vst [vmem:[%s3 + $0x78] sm:$0xff] %v195
  // Predicated region
  $region14: #{_gcnii_forward_impl.7} parent=0 // pred_check
    _
  $region15: #{_gcnii_forward_impl.7} parent=0 // pred_check_branch
    %215 = sbr.rel (0) target = $region17
  $region16: #{_gcnii_forward_impl.7} parent=0 // pred_region
    _
  $region17: #{_gcnii_forward_impl.7} parent=0 // pred_fallthru
    _
  // Predicated region
  $region18: #{_gcnii_forward_impl.7} parent=0 // pred_check
    _
  $region19: #{_gcnii_forward_impl.7} parent=0 // pred_check_branch
    %217 = sbr.rel (0) target = $region21
  $region20: #{_gcnii_forward_impl.7} parent=0 // pred_region
    _
  $region21: #{_gcnii_forward_impl.7} parent=0 // pred_fallthru
    _

</llo_original>
